<compile_context>
chip_gen: v5e
topology: v5e:2x2
jax: 0.10.0
libtpu: 0.0.40
codegen_flags: <defaults>
</compile_context>

<pallas_src>
import functools

import jax
import jax.numpy as jnp
from jax import lax
from jax.experimental import pallas as pl
from jax.experimental.pallas import tpu as pltpu


# ----------------------------- Pallas kernel --------------------------------


def _fused_dattn_kernel(y_ref, xs_ref, bias_ref,
                        wq_ref, bq_ref, wkv_ref, bkv_ref, wo_ref, bo_ref,
                        o_ref, *scratch, n_heads, n_head_channels, unroll_heads):
    """One grid step = one batch item x one query tile; all heads handled in this step."""
    C = o_ref.shape[1]
    hc = n_head_channels
    cdt = y_ref.dtype                        # MXU input dtype (bf16 or f32)

    y_blk = y_ref[0]                         # (C, tM)
    xs = xs_ref[0]                           # (C, N)

    # q projection -- softmax scale is pre-folded into wq/bq.
    q_f32 = jnp.dot(wq_ref[...], y_blk, preferred_element_type=jnp.float32) + bq_ref[...]
    # fused k/v projection: single matmul on the stacked [Wk; Wv] weight.
    kv_f32 = jnp.dot(wkv_ref[...], xs, preferred_element_type=jnp.float32) + bkv_ref[...]
    # One tile-aligned cast each (instead of nh*3 small strided per-head casts); this also
    # ends the f32 q/kv live ranges immediately (less vreg pressure / spill).
    q = q_f32.astype(cdt)                    # (C, tM)
    kv = kv_f32.astype(cdt)                  # (2C, N)

    def head_attn(q_h, k_h, v_h, bias_h):
        # scores (N, tM): contraction over hc via dot_general (no .T materialized);
        # the 128-lane axis is the query tile, not the small n_sample axis.
        s = lax.dot_general(k_h, q_h, (((0,), (0,)), ((), ())),
                            preferred_element_type=jnp.float32)
        s = s + bias_h.astype(jnp.float32)                      # bias streamed as bf16
        s = s - jnp.max(s, axis=0, keepdims=True)
        p = jnp.exp(s)
        denom = jnp.sum(p, axis=0, keepdims=True)
        p = p * pl.reciprocal(denom, approx=True)               # normalize on the EUP
        # (hc, tM) = v_h @ p  -- transpose-free in this layout.
        return jnp.dot(v_h, p.astype(cdt), preferred_element_type=jnp.float32)

    if unroll_heads:
        # Small n_heads: static unroll; per-head outputs are concatenated in registers and fed
        # straight into the Wo matmul (no f32 scratch store/load round trip).
        outs = []
        for h in range(n_heads):
            outs.append(head_attn(q[h * hc:(h + 1) * hc, :],
                                  kv[h * hc:(h + 1) * hc, :],
                                  kv[C + h * hc:C + (h + 1) * hc, :],
                                  bias_ref[0, h]))
        o_cat = jnp.concatenate(outs, axis=0).astype(cdt)       # (C, tM), one aligned cast
    else:
        # Large n_heads: fori_loop bounds the live ranges of the (N, tM) f32 intermediates.
        q_sc, kv_sc, acc_sc = scratch
        q_sc[...] = q
        kv_sc[...] = kv

        def body(h, carry):
            base = pl.multiple_of(h * hc, hc)
            vbase = pl.multiple_of(C + h * hc, hc)
            o_h = head_attn(q_sc[pl.ds(base, hc), :],
                            kv_sc[pl.ds(base, hc), :],
                            kv_sc[pl.ds(vbase, hc), :],
                            bias_ref[0, h])
            acc_sc[pl.ds(base, hc), :] = o_h
            return carry

        lax.fori_loop(0, n_heads, body, 0)
        # TODO(synk): when hc % 16 == 0 store per-head results already in cdt scratch to skip this cast.
        o_cat = acc_sc[...].astype(cdt)

    # fused output projection.
    out = jnp.dot(wo_ref[...], o_cat, preferred_element_type=jnp.float32) + bo_ref[...]
    o_ref[0] = out.astype(o_ref.dtype)


# ----------------------- tiling / VMEM planning helpers ----------------------


def _probe_kernel(x_ref, o_ref):
    o_ref[...] = x_ref[...] + 1.0


@functools.lru_cache(maxsize=1)
def _single_buffering_supported():
    """Probe whether pipeline_mode=pl.Buffered(1) (single-buffered constant operands) works."""
    try:
        fn = pl.pallas_call(
            _probe_kernel,
            out_shape=jax.ShapeDtypeStruct((8, 128), jnp.float32),
            grid=(2,),
            in_specs=[pl.BlockSpec((8, 128), lambda i: (0, 0),
                                   pipeline_mode=pl.Buffered(1))],
            out_specs=pl.BlockSpec((8, 128), lambda i: (0, 0)),
        )
        jax.block_until_ready(fn(jnp.zeros((8, 128), jnp.float32)))
        return True
    except Exception:
        return False


def _const_spec(shape):
    """BlockSpec for a grid-invariant operand (weights/biases): DMA'd once, single-buffered."""
    index_map = lambda b, m: (0,) * len(shape)
    if _single_buffering_supported():
        return pl.BlockSpec(shape, index_map, pipeline_mode=pl.Buffered(1))
    return pl.BlockSpec(shape, index_map)


def _vmem_capacity_bytes():
    try:
        return int(pltpu.get_tpu_info().vmem_capacity_bytes)
    except Exception:
        return 64 << 20     # conservative fallback: v7x has 64 MiB VMEM per TensorCore


def _plan_tile_and_vmem(*, C, nh, N, Mp, B, cdt_bytes, bias_bytes, out_bytes,
                        use_scratch, target=512):
    """Pick the query tile tM and an explicit scoped-VMEM limit from actual block bytes."""
    budget = int(_vmem_capacity_bytes() * 0.75)    # headroom below physical VMEM (v7x: ~48 MiB)
    wbuf = 1 if _single_buffering_supported() else 2

    def need(tM):
        # double-buffered per-step blocks (the bf16 rpe-bias block dominates)
        blocks = 2 * (C * tM * cdt_bytes           # y tile
                      + C * N * cdt_bytes          # x_sampled
                      + nh * N * tM * bias_bytes   # rpe bias
                      + C * tM * out_bytes)        # output tile
        wts = wbuf * (4 * C * C * cdt_bytes + 4 * C * 4)
        scr = ((C * tM + 2 * C * N) * cdt_bytes + C * tM * 4) if use_scratch else 0
        interm = 2 * N * tM * 4 + 3 * C * tM * 4   # (N,tM) f32 s/p + f32 q/kv/out values
        return blocks + wts + scr + interm

    tiles = sorted({t for t in range(128, min(target, Mp) + 1, 128) if Mp % t == 0} | {128},
                   reverse=True)
    tM = next((t for t in tiles if need(t) <= budget), tiles[-1])
    # Keep >= 3 grid steps per TensorCore (v7x runs 2 TCs across the 'parallel' axes) so the
    # bias/y/out DMAs overlap with compute -- but never shrink below 256 purely for depth.
    while B * (Mp // tM) < 6 and tM > 256:
        smaller = [t for t in tiles if t < tM]
        if not smaller:
            break
        tM = smaller[0]
    vmem_limit = min(budget, max(32 << 20, need(tM) * 3 // 2 + (8 << 20)))
    return tM, int(vmem_limit)


# ------------------------------ fused attention -------------------------------


def fused_deformable_attention(y_bcm, xs_bcn, attn_bias, wq_s, bq_s, wkv, bkv,
                               wo, bo, *, n_heads, n_head_channels,
                               query_tile=512, out_dtype=jnp.float32):
    """y_bcm: (B, C, M)  xs_bcn: (B, C, N)  attn_bias: (B, nh, N, M) -> (B, C, M) out_dtype."""
    B, C, M = y_bcm.shape
    N = xs_bcn.shape[-1]
    nh = n_heads
    cdt = y_bcm.dtype

    # Pad queries up to a lane-aligned multiple of 128 so tM stays small and lane-dense
    # (padded columns are computed on garbage-free finite data and sliced off afterwards).
    Mp = ((M + 127) // 128) * 128
    if Mp != M:
        y_bcm = jnp.pad(y_bcm, ((0, 0), (0, 0), (0, Mp - M)))
        attn_bias = jnp.pad(attn_bias, ((0, 0), (0, 0), (0, 0), (0, Mp - M)))

    unroll = nh < 8   # static unroll only for small head counts (live-range pressure otherwise)
    tM, vmem_limit = _plan_tile_and_vmem(
        C=C, nh=nh, N=N, Mp=Mp, B=B,
        cdt_bytes=jnp.dtype(cdt).itemsize,
        bias_bytes=jnp.dtype(attn_bias.dtype).itemsize,
        out_bytes=jnp.dtype(out_dtype).itemsize,
        use_scratch=not unroll, target=query_tile)
    n_mt = Mp // tM

    kernel = functools.partial(_fused_dattn_kernel, n_heads=nh,
                               n_head_channels=n_head_channels, unroll_heads=unroll)

    scratch = [] if unroll else [pltpu.VMEM((C, tM), cdt),
                                 pltpu.VMEM((2 * C, N), cdt),
                                 pltpu.VMEM((C, tM), jnp.float32)]

    out = pl.pallas_call(
        kernel,
        out_shape=jax.ShapeDtypeStruct((B, C, Mp), out_dtype),
        grid_spec=pltpu.PrefetchScalarGridSpec(
            num_scalar_prefetch=0,
            grid=(B, n_mt),
            in_specs=[
                pl.BlockSpec((1, C, tM), lambda b, m: (b, 0, m)),        # y
                pl.BlockSpec((1, C, N), lambda b, m: (b, 0, 0)),         # x_sampled
                pl.BlockSpec((1, nh, N, tM), lambda b, m: (b, 0, 0, m)), # rpe bias (bf16)
                _const_spec((C, C)),                                     # wq*scale
                _const_spec((C, 1)),                                     # bq*scale
                _const_spec((2 * C, C)),                                 # [wk; wv]
                _const_spec((2 * C, 1)),                                 # [bk; bv]
                _const_spec((C, C)),                                     # wo
                _const_spec((C, 1)),                                     # bo
            ],
            out_specs=pl.BlockSpec((1, C, tM), lambda b, m: (b, 0, m)),
            scratch_shapes=scratch,
        ),
        compiler_params=pltpu.CompilerParams(
            dimension_semantics=("parallel", "parallel"),
            vmem_limit_bytes=vmem_limit,
        ),
    )(y_bcm, xs_bcn, attn_bias, wq_s, bq_s, wkv, bkv, wo, bo)

    return out if Mp == M else out[:, :, :M]


# ------------------------------ JAX glue ops ---------------------------------


def conv2d_nchw(x, w, b=None, stride=1, padding=0, groups=1):
    out = lax.conv_general_dilated(
        x, w,
        window_strides=(stride, stride),
        padding=[(padding, padding), (padding, padding)],
        dimension_numbers=("NCHW", "OIHW", "NCHW"),
        feature_group_count=groups,
    )
    if b is not None:
        out = out + b.reshape(1, -1, 1, 1)
    return out


def layernorm_channels_nchw(x, gamma, beta, eps=1e-5):
    # LayerNormProxy: LN over channel dim (b c h w -> b h w c -> LN -> back)
    xt = jnp.transpose(x, (0, 2, 3, 1))
    mu = jnp.mean(xt, axis=-1, keepdims=True)
    var = jnp.mean((xt - mu) ** 2, axis=-1, keepdims=True)
    xt = (xt - mu) / jnp.sqrt(var + eps) * gamma + beta
    return jnp.transpose(xt, (0, 3, 1, 2))


def grid_sample_bilinear(inp, grid):
    """F.grid_sample(mode='bilinear', padding_mode='zeros', align_corners=False).

    inp: (N, C, Hin, Win), grid: (N, Hout, Wout, 2) with (x, y) in [-1, 1].
    """
    N, C, Hin, Win = inp.shape
    gx = grid[..., 0]
    gy = grid[..., 1]
    ix = ((gx + 1.0) * Win - 1.0) / 2.0
    iy = ((gy + 1.0) * Hin - 1.0) / 2.0
    ix0 = jnp.floor(ix)
    iy0 = jnp.floor(iy)
    ix1 = ix0 + 1.0
    iy1 = iy0 + 1.0
    wx1 = ix - ix0
    wx0 = 1.0 - wx1
    wy1 = iy - iy0
    wy0 = 1.0 - wy1

    def gather(iy_, ix_):
        valid = (ix_ >= 0) & (ix_ <= Win - 1) & (iy_ >= 0) & (iy_ <= Hin - 1)
        ixc = jnp.clip(ix_, 0, Win - 1).astype(jnp.int32)
        iyc = jnp.clip(iy_, 0, Hin - 1).astype(jnp.int32)

        def per_batch(im, iyb, ixb):
            return im[:, iyb, ixb]  # (C, Hout, Wout)

        vals = jax.vmap(per_batch)(inp, iyc, ixc)  # (N, C, Hout, Wout)
        return vals * valid[:, None].astype(inp.dtype)

    v00 = gather(iy0, ix0)
    v01 = gather(iy0, ix1)
    v10 = gather(iy1, ix0)
    v11 = gather(iy1, ix1)
    out = (v00 * (wy0 * wx0)[:, None]
           + v01 * (wy0 * wx1)[:, None]
           + v10 * (wy1 * wx0)[:, None]
           + v11 * (wy1 * wx1)[:, None])
    return out


def get_ref_points(H_key, W_key, Bg, dtype):
    ref_y = jnp.linspace(0.5, H_key - 0.5, H_key, dtype=dtype)
    ref_x = jnp.linspace(0.5, W_key - 0.5, W_key, dtype=dtype)
    ry, rx = jnp.meshgrid(ref_y, ref_x, indexing="ij")
    ref = jnp.stack((ry, rx), axis=-1)
    ref = ref.at[..., 1].set(ref[..., 1] / W_key * 2.0 - 1.0)
    ref = ref.at[..., 0].set(ref[..., 0] / H_key * 2.0 - 1.0)
    return jnp.broadcast_to(ref[None], (Bg, H_key, W_key, 2))


# ---------------------------- DAttentionFuse ---------------------------------


def init_params(key, cfg):
    nc = cfg["n_heads"] * cfg["n_head_channels"]
    ngc = nc // cfg["n_groups"]
    kk = cfg["kk"]
    ks = jax.random.split(key, 12)
    p = {
        # conv_offset: Conv2d(2*ngc, 2*ngc, kk, stride, kk//2, groups=ngc)
        "off_w1": 0.1 * jax.random.normal(ks[0], (2 * ngc, 2, kk, kk), jnp.float32),
        "off_b1": 0.1 * jax.random.normal(ks[1], (2 * ngc,), jnp.float32),
        "off_ln_g": jnp.ones((2 * ngc,), jnp.float32),
        "off_ln_b": jnp.zeros((2 * ngc,), jnp.float32),
        # Conv2d(2*ngc, 2, 1, bias=False)
        "off_w2": 0.1 * jax.random.normal(ks[2], (2, 2 * ngc, 1, 1), jnp.float32),
        # 1x1 projections
        "wq": 0.1 * jax.random.normal(ks[3], (nc, nc), jnp.float32),
        "bq": 0.1 * jax.random.normal(ks[4], (nc,), jnp.float32),
        "wk": 0.1 * jax.random.normal(ks[5], (nc, nc), jnp.float32),
        "bk": 0.1 * jax.random.normal(ks[6], (nc,), jnp.float32),
        "wv": 0.1 * jax.random.normal(ks[7], (nc, nc), jnp.float32),
        "bv": 0.1 * jax.random.normal(ks[8], (nc,), jnp.float32),
        "wo": 0.1 * jax.random.normal(ks[9], (nc, nc), jnp.float32),
        "bo": 0.1 * jax.random.normal(ks[10], (nc,), jnp.float32),
        # rpe_table: (n_heads, 2*kv_h - 1, 2*kv_w - 1), trunc_normal std=0.01
        "rpe_table": 0.01 * jax.random.normal(
            ks[11], (cfg["n_heads"], cfg["kv_h"] * 2 - 1, cfg["kv_w"] * 2 - 1), jnp.float32),
    }
    return p


def d_attention_fuse_forward(params, x, y, cfg):
    B, C, H, W = x.shape
    g = cfg["n_groups"]
    nh = cfg["n_heads"]
    hc = cfg["n_head_channels"]
    ngc = C // g
    ngh = nh // g
    kk = cfg["kk"]
    stride = cfg["stride"]
    orf = cfg["offset_range_factor"]
    scale = hc ** (-0.5)
    dtype = x.dtype
    cdt = jnp.bfloat16 if cfg.get("bf16_matmul", True) else jnp.float32
    bias_dt = jnp.bfloat16 if cfg.get("bf16_bias", True) else jnp.float32
    out_dt = jnp.bfloat16 if cfg.get("bf16_out", False) else jnp.float32

    # ---- offset branch (JAX glue) ----
    q_off = jnp.concatenate([x, y], axis=1).reshape(B * g, 2 * ngc, H, W)
    o1 = conv2d_nchw(q_off, params["off_w1"], params["off_b1"],
                     stride=stride, padding=kk // 2, groups=ngc)
    o1 = layernorm_channels_nchw(o1, params["off_ln_g"], params["off_ln_b"])
    o1 = jax.nn.gelu(o1, approximate=False)
    offset = conv2d_nchw(o1, params["off_w2"], None)             # (B*g, 2, Hk, Wk)
    Hk, Wk = offset.shape[2], offset.shape[3]
    n_sample = Hk * Wk

    if orf > 0:
        offset_range = jnp.array([1.0 / Hk, 1.0 / Wk], dtype).reshape(1, 2, 1, 1)
        offset = jnp.tanh(offset) * offset_range * orf
    offset = jnp.transpose(offset, (0, 2, 3, 1))                 # (B*g, Hk, Wk, 2)
    reference = get_ref_points(Hk, Wk, B * g, dtype)
    pos = offset + reference if orf >= 0 else jnp.tanh(offset + reference)

    # ---- deformed sampling of x ----
    # TODO(synk): grid_sample gathers stay in XLA; a Pallas DMA-gather kernel is the next step.
    x_sampled = grid_sample_bilinear(x.reshape(B * g, ngc, H, W), pos[..., ::-1])
    x_sampled = x_sampled.reshape(B, C, n_sample)

    HW = H * W
    # ---- relative position bias, produced directly in (B, nh, n_sample, HW) layout ----
    if cfg["use_pe"]:
        rpe = params["rpe_table"]
        rpe_bias = jnp.broadcast_to(rpe[None], (B,) + rpe.shape)
        rpe_bias = rpe_bias.reshape(B * g, ngh, 2 * H - 1, 2 * W - 1)
        q_grid = get_ref_points(H, W, B * g, dtype)
        disp_t = (q_grid.reshape(B * g, 1, HW, 2)
                  - pos.reshape(B * g, n_sample, 1, 2)) * 0.5     # key-major layout
        attn_bias = grid_sample_bilinear(rpe_bias, disp_t[..., ::-1])
        attn_bias = attn_bias.reshape(B, nh, n_sample, HW).astype(bias_dt)
    else:
        attn_bias = jnp.zeros((B, nh, n_sample, HW), bias_dt)

    # ---- fused projections + attention (single Pallas kernel) ----
    wq_s = (params["wq"] * scale).astype(cdt)                     # fold softmax scale
    bq_s = (params["bq"] * scale).reshape(C, 1).astype(jnp.float32)
    wkv = jnp.concatenate([params["wk"], params["wv"]], axis=0).astype(cdt)
    bkv = jnp.concatenate([params["bk"], params["bv"]], axis=0).reshape(2 * C, 1).astype(jnp.float32)
    wo = params["wo"].astype(cdt)
    bo = params["bo"].reshape(C, 1).astype(jnp.float32)

    out = fused_deformable_attention(
        y.reshape(B, C, HW).astype(cdt), x_sampled.astype(cdt), attn_bias,
        wq_s, bq_s, wkv, bkv, wo, bo, n_heads=nh, n_head_channels=hc,
        out_dtype=out_dt)

    out = out.reshape(B, C, H, W).astype(dtype)
    # attn_drop / proj_drop are identity at p=0 (eval)
    return (out,
            pos.reshape(B, g, Hk, Wk, 2),
            reference.reshape(B, g, Hk, Wk, 2))


def _reference_forward(params, x, y, cfg):
    """Pure-JAX (f32) re-implementation of the PyTorch forward, for validation."""
    B, C, H, W = x.shape
    g = cfg["n_groups"]
    nh = cfg["n_heads"]
    hc = cfg["n_head_channels"]
    ngc = C // g
    ngh = nh // g
    kk = cfg["kk"]
    stride = cfg["stride"]
    orf = cfg["offset_range_factor"]
    scale = hc ** (-0.5)
    dtype = x.dtype

    q_off = jnp.concatenate([x, y], axis=1).reshape(B * g, 2 * ngc, H, W)
    o1 = conv2d_nchw(q_off, params["off_w1"], params["off_b1"],
                     stride=stride, padding=kk // 2, groups=ngc)
    o1 = layernorm_channels_nchw(o1, params["off_ln_g"], params["off_ln_b"])
    o1 = jax.nn.gelu(o1, approximate=False)
    offset = conv2d_nchw(o1, params["off_w2"], None)
    Hk, Wk = offset.shape[2], offset.shape[3]
    n_sample = Hk * Wk
    if orf > 0:
        offset_range = jnp.array([1.0 / Hk, 1.0 / Wk], dtype).reshape(1, 2, 1, 1)
        offset = jnp.tanh(offset) * offset_range * orf
    offset = jnp.transpose(offset, (0, 2, 3, 1))
    reference = get_ref_points(Hk, Wk, B * g, dtype)
    pos = offset + reference if orf >= 0 else jnp.tanh(offset + reference)

    q = jnp.einsum('oc,bcp->bop', params["wq"], y.reshape(B, C, H * W)) + params["bq"][None, :, None]
    x_sampled = grid_sample_bilinear(x.reshape(B * g, ngc, H, W), pos[..., ::-1]).reshape(B, C, n_sample)
    k = jnp.einsum('oc,bcp->bop', params["wk"], x_sampled) + params["bk"][None, :, None]
    v = jnp.einsum('oc,bcp->bop', params["wv"], x_sampled) + params["bv"][None, :, None]
    q = q.reshape(B * nh, hc, H * W)
    k = k.reshape(B * nh, hc, n_sample)
    v = v.reshape(B * nh, hc, n_sample)
    attn = jnp.einsum('bcm,bcn->bmn', q, k) * scale
    if cfg["use_pe"]:
        rpe_bias = jnp.broadcast_to(params["rpe_table"][None], (B,) + params["rpe_table"].shape)
        rpe_bias = rpe_bias.reshape(B * g, ngh, 2 * H - 1, 2 * W - 1)
        q_grid = get_ref_points(H, W, B * g, dtype)
        disp = (q_grid.reshape(B * g, H * W, 1, 2) - pos.reshape(B * g, 1, n_sample, 2)) * 0.5
        attn_bias = grid_sample_bilinear(rpe_bias, disp[..., ::-1]).reshape(B * nh, H * W, n_sample)
        attn = attn + attn_bias
    attn = jax.nn.softmax(attn, axis=2)
    out = jnp.einsum('bmn,bcn->bcm', attn, v).reshape(B, C, H * W)
    out = jnp.einsum('oc,bcp->bop', params["wo"], out) + params["bo"][None, :, None]
    return (out.reshape(B, C, H, W),
            pos.reshape(B, g, Hk, Wk, 2),
            reference.reshape(B, g, Hk, Wk, 2))


# --------------------------------- main --------------------------------------

if __name__ == "__main__":
    # Small configs consistent with the module defaults (stage_idx=3 -> kk=3).
    base_cfg = {
        "q_h": 4, "q_w": 32,
        "kv_h": 4, "kv_w": 32,
        "n_heads": 4,
        "n_head_channels": 8,
        "n_groups": 2,
        "stride": 2,
        "offset_range_factor": 2,
        "use_pe": True,
        "kk": 3,
        "bf16_matmul": True,   # bf16 MXU inputs, f32 accumulate / f32 softmax
        "bf16_bias": True,     # stream the rpe bias (dominant HBM/VMEM tenant) as bf16
        "bf16_out": False,     # keep f32 output to match the PyTorch module interface
    }
    # Populate the single-buffering feature probe outside jit tracing.
    _single_buffering_supported()

    configs = [
        ("M=128 / lane-exact", dict(base_cfg)),
        ("M=96  / query-padding path", dict(base_cfg, q_w=24, kv_w=24)),
    ]

    for name, cfg in configs:
        B = 2
        C = cfg["n_heads"] * cfg["n_head_channels"]   # 32
        H, W = cfg["q_h"], cfg["q_w"]

        key = jax.random.PRNGKey(0)
        kx, ky, kp = jax.random.split(key, 3)
        x = jax.random.normal(kx, (B, C, H, W), jnp.float32)
        y = jax.random.normal(ky, (B, C, H, W), jnp.float32)
        params = init_params(kp, cfg)

        fwd = jax.jit(functools.partial(d_attention_fuse_forward, cfg=cfg))
        out, pos, ref = fwd(params, x, y)
        jax.block_until_ready((out, pos, ref))

        Hk = (H + 2 * (cfg["kk"] // 2) - cfg["kk"]) // cfg["stride"] + 1
        Wk = (W + 2 * (cfg["kk"] // 2) - cfg["kk"]) // cfg["stride"] + 1
        assert out.shape == (B, C, H, W), name
        assert pos.shape == (B, cfg["n_groups"], Hk, Wk, 2), name
        assert ref.shape == pos.shape, name

        # numerical check of the fused Pallas path against a pure-JAX f32 reference
        ref_fwd = jax.jit(functools.partial(_reference_forward, cfg=cfg))
        out_ref, pos_ref, _ = ref_fwd(params, x, y)
        jax.block_until_ready((out_ref, pos_ref))
        assert float(jnp.max(jnp.abs(pos - pos_ref))) < 1e-5, name
        # bf16 matmul + bf16 bias + approx reciprocal tolerance
        assert float(jnp.max(jnp.abs(out - out_ref))) < 5e-2, name

    print("KERNEL_OK")
</pallas_src>

<mosaic_0001>
module attributes {stable_mosaic.version = 11 : i64} {
  func.func @_probe_kernel(%arg0: i32, %arg1: memref<8x128xf32, #tpu.memory_space<vmem>>, %arg2: memref<8x128xf32, #tpu.memory_space<vmem>>) attributes {dimension_semantics = [#tpu.dimension_semantics<arbitrary>], iteration_bounds = array<i64: 2>, scalar_prefetch = 0 : i64, scratch_operands = 0 : i64, tpu.core_type = #tpu.core_type<tc>, window_params = [{pipeline_mode = #tpu.pipeline_mode<synchronous>, transform_indices = @transform_0, window_bounds = array<i64: 8, 128>}, {pipeline_mode = #tpu.pipeline_mode<synchronous>, transform_indices = @transform_1, window_bounds = array<i64: 8, 128>}]} {
    %c0 = arith.constant 0 : index
    %c0_0 = arith.constant 0 : index
    %0 = vector.load %arg1[%c0, %c0_0] : memref<8x128xf32, #tpu.memory_space<vmem>>, vector<8x128xf32>
    %cst = arith.constant 1.000000e+00 : f32
    %1 = vector.broadcast %cst : f32 to vector<8x128xf32>
    %2 = arith.addf %0, %1 : vector<8x128xf32>
    %c0_1 = arith.constant 0 : index
    %c0_2 = arith.constant 0 : index
    %3 = vector.load %arg2[%c0_1, %c0_2] : memref<8x128xf32, #tpu.memory_space<vmem>>, vector<8x128xf32>
    tpu.vector_store %arg2[%c0_1, %c0_2], %2 {strides = array<i32>} : memref<8x128xf32, #tpu.memory_space<vmem>>, vector<8x128xf32>,
    return
  }
  func.func @transform_0(%arg0: i32) -> (i32, i32) {
    %c0_i32 = arith.constant 0 : i32
    %c0_i32_0 = arith.constant 0 : i32
    %c0_i32_1 = arith.constant 0 : i32
    return %c0_i32, %c0_i32_0 : i32, i32
  }
  func.func @transform_1(%arg0: i32) -> (i32, i32) {
    %c0_i32 = arith.constant 0 : i32
    %c0_i32_0 = arith.constant 0 : i32
    %c0_i32_1 = arith.constant 0 : i32
    return %c0_i32, %c0_i32_0 : i32, i32
  }
}

module attributes {stable_mosaic.version = 11 : i64} {
  func.func @_fused_dattn_kernel(%arg0: i32, %arg1: i32, %arg2: memref<1x32x128xbf16, #tpu.memory_space<vmem>>, %arg3: memref<1x32x32xbf16, #tpu.memory_space<vmem>>, %arg4: memref<1x4x32x128xbf16, #tpu.memory_space<vmem>>, %arg5: memref<32x32xbf16, #tpu.memory_space<vmem>>, %arg6: memref<32x1xf32, #tpu.memory_space<vmem>>, %arg7: memref<64x32xbf16, #tpu.memory_space<vmem>>, %arg8: memref<64x1xf32, #tpu.memory_space<vmem>>, %arg9: memref<32x32xbf16, #tpu.memory_space<vmem>>, %arg10: memref<32x1xf32, #tpu.memory_space<vmem>>, %arg11: memref<1x32x128xf32, #tpu.memory_space<vmem>>) attributes {dimension_semantics = [#tpu.dimension_semantics<parallel>, #tpu.dimension_semantics<parallel>], iteration_bounds = array<i64: 2, 1>, scalar_prefetch = 0 : i64, scratch_operands = 0 : i64, tpu.core_type = #tpu.core_type<tc>, window_params = [{transform_indices = @transform_0, window_bounds = array<i64: 1, 32, 128>}, {transform_indices = @transform_1, window_bounds = array<i64: 1, 32, 32>}, {transform_indices = @transform_2, window_bounds = array<i64: 1, 4, 32, 128>}, {pipeline_mode = #tpu.pipeline_mode<synchronous>, transform_indices = @transform_3, window_bounds = array<i64: 32, 32>}, {pipeline_mode = #tpu.pipeline_mode<synchronous>, transform_indices = @transform_4, window_bounds = array<i64: 32, 1>}, {pipeline_mode = #tpu.pipeline_mode<synchronous>, transform_indices = @transform_5, window_bounds = array<i64: 64, 32>}, {pipeline_mode = #tpu.pipeline_mode<synchronous>, transform_indices = @transform_6, window_bounds = array<i64: 64, 1>}, {pipeline_mode = #tpu.pipeline_mode<synchronous>, transform_indices = @transform_7, window_bounds = array<i64: 32, 32>}, {pipeline_mode = #tpu.pipeline_mode<synchronous>, transform_indices = @transform_8, window_bounds = array<i64: 32, 1>}, {transform_indices = @transform_9, window_bounds = array<i64: 1, 32, 128>}]} {
    %c0 = arith.constant 0 : index
    %c0_0 = arith.constant 0 : index
    %c0_1 = arith.constant 0 : index
    %0 = vector.load %arg2[%c0, %c0_0, %c0_1] : memref<1x32x128xbf16, #tpu.memory_space<vmem>>, vector<1x32x128xbf16>
    %1 = vector.shape_cast %0 : vector<1x32x128xbf16> to vector<32x128xbf16>
    %c0_2 = arith.constant 0 : index
    %c0_3 = arith.constant 0 : index
    %c0_4 = arith.constant 0 : index
    %2 = vector.load %arg3[%c0_2, %c0_3, %c0_4] : memref<1x32x32xbf16, #tpu.memory_space<vmem>>, vector<1x32x32xbf16>
    %3 = vector.shape_cast %2 : vector<1x32x32xbf16> to vector<32x32xbf16>
    %c0_5 = arith.constant 0 : index
    %c0_6 = arith.constant 0 : index
    %4 = vector.load %arg5[%c0_5, %c0_6] : memref<32x32xbf16, #tpu.memory_space<vmem>>, vector<32x32xbf16>
    %cst = arith.constant dense<0.000000e+00> : vector<32x128xf32>
    %5 = tpu.matmul %4, %1, %cst {dimension_numbers = #tpu.dot_dimension_numbers<[1], [0], [0], [1], [0, 0, 1, 1], [], []>} : vector<32x32xbf16>, vector<32x128xbf16>, vector<32x128xf32> -> vector<32x128xf32>
    %c0_7 = arith.constant 0 : index
    %c0_8 = arith.constant 0 : index
    %6 = vector.load %arg6[%c0_7, %c0_8] : memref<32x1xf32, #tpu.memory_space<vmem>>, vector<32x1xf32>
    %7 = vector.broadcast %6 : vector<32x1xf32> to vector<32x128xf32>
    %8 = arith.addf %5, %7 : vector<32x128xf32>
    %c0_9 = arith.constant 0 : index
    %c0_10 = arith.constant 0 : index
    %9 = vector.load %arg7[%c0_9, %c0_10] : memref<64x32xbf16, #tpu.memory_space<vmem>>, vector<64x32xbf16>
    %cst_11 = arith.constant dense<0.000000e+00> : vector<64x32xf32>
    %10 = tpu.matmul %9, %3, %cst_11 {dimension_numbers = #tpu.dot_dimension_numbers<[1], [0], [0], [1], [0, 0, 1, 1], [], []>} : vector<64x32xbf16>, vector<32x32xbf16>, vector<64x32xf32> -> vector<64x32xf32>
    %c0_12 = arith.constant 0 : index
    %c0_13 = arith.constant 0 : index
    %11 = vector.load %arg8[%c0_12, %c0_13] : memref<64x1xf32, #tpu.memory_space<vmem>>, vector<64x1xf32>
    %12 = vector.broadcast %11 : vector<64x1xf32> to vector<64x32xf32>
    %13 = arith.addf %10, %12 : vector<64x32xf32>
    %14 = arith.truncf %8 : vector<32x128xf32> to vector<32x128xbf16>
    %15 = arith.truncf %13 : vector<64x32xf32> to vector<64x32xbf16>
    %16 = vector.extract_strided_slice %14 {offsets = [0, 0], sizes = [8, 128], strides = [1, 1]} : vector<32x128xbf16> to vector<8x128xbf16>
    %17 = vector.extract_strided_slice %15 {offsets = [0, 0], sizes = [8, 32], strides = [1, 1]} : vector<64x32xbf16> to vector<8x32xbf16>
    %18 = vector.extract_strided_slice %15 {offsets = [32, 0], sizes = [8, 32], strides = [1, 1]} : vector<64x32xbf16> to vector<8x32xbf16>
    %c0_14 = arith.constant 0 : index
    %c0_15 = arith.constant 0 : index
    %c0_16 = arith.constant 0 : index
    %c0_17 = arith.constant 0 : index
    %19 = vector.load %arg4[%c0_14, %c0_15, %c0_16, %c0_17] : memref<1x4x32x128xbf16, #tpu.memory_space<vmem>>, vector<1x1x32x128xbf16>
    %20 = vector.shape_cast %19 : vector<1x1x32x128xbf16> to vector<32x128xbf16>
    %cst_18 = arith.constant dense<0.000000e+00> : vector<32x128xf32>
    %21 = tpu.matmul %17, %16, %cst_18 {dimension_numbers = #tpu.dot_dimension_numbers<[0], [0], [1], [1], [0, 1, 1, 1], [], []>} : vector<8x32xbf16>, vector<8x128xbf16>, vector<32x128xf32> -> vector<32x128xf32>
    %22 = arith.extf %20 : vector<32x128xbf16> to vector<32x128xf32>
    %23 = arith.addf %21, %22 : vector<32x128xf32>
    %cst_19 = arith.constant dense<0xFF800000> : vector<128xf32>
    %24 = vector.multi_reduction <maximumf>, %23, %cst_19 [0] : vector<32x128xf32> to vector<128xf32>
    %25 = vector.shape_cast %24 : vector<128xf32> to vector<1x128xf32>
    %26 = vector.broadcast %25 : vector<1x128xf32> to vector<32x128xf32>
    %27 = arith.subf %23, %26 : vector<32x128xf32>
    %28 = math.exp %27 : vector<32x128xf32>
    %cst_20 = arith.constant dense<0.000000e+00> : vector<128xf32>
    %29 = vector.multi_reduction <add>, %28, %cst_20 [0] : vector<32x128xf32> to vector<128xf32>
    %30 = vector.shape_cast %29 : vector<128xf32> to vector<1x128xf32>
    %31 = tpu.reciprocal %30 {approx = true} : vector<1x128xf32> -> vector<1x128xf32>
    %32 = vector.broadcast %31 : vector<1x128xf32> to vector<32x128xf32>
    %33 = arith.mulf %28, %32 : vector<32x128xf32>
    %34 = arith.truncf %33 : vector<32x128xf32> to vector<32x128xbf16>
    %cst_21 = arith.constant dense<0.000000e+00> : vector<8x128xf32>
    %35 = tpu.matmul %18, %34, %cst_21 {dimension_numbers = #tpu.dot_dimension_numbers<[1], [0], [0], [1], [0, 0, 1, 1], [], []>} : vector<8x32xbf16>, vector<32x128xbf16>, vector<8x128xf32> -> vector<8x128xf32>
    %36 = vector.extract_strided_slice %14 {offsets = [8, 0], sizes = [8, 128], strides = [1, 1]} : vector<32x128xbf16> to vector<8x128xbf16>
    %37 = vector.extract_strided_slice %15 {offsets = [8, 0], sizes = [8, 32], strides = [1, 1]} : vector<64x32xbf16> to vector<8x32xbf16>
    %38 = vector.extract_strided_slice %15 {offsets = [40, 0], sizes = [8, 32], strides = [1, 1]} : vector<64x32xbf16> to vector<8x32xbf16>
    %c0_22 = arith.constant 0 : index
    %c1 = arith.constant 1 : index
    %c0_23 = arith.constant 0 : index
    %c0_24 = arith.constant 0 : index
    %39 = vector.load %arg4[%c0_22, %c1, %c0_23, %c0_24] : memref<1x4x32x128xbf16, #tpu.memory_space<vmem>>, vector<1x1x32x128xbf16>
    %40 = vector.shape_cast %39 : vector<1x1x32x128xbf16> to vector<32x128xbf16>
    %cst_25 = arith.constant dense<0.000000e+00> : vector<32x128xf32>
    %41 = tpu.matmul %37, %36, %cst_25 {dimension_numbers = #tpu.dot_dimension_numbers<[0], [0], [1], [1], [0, 1, 1, 1], [], []>} : vector<8x32xbf16>, vector<8x128xbf16>, vector<32x128xf32> -> vector<32x128xf32>
    %42 = arith.extf %40 : vector<32x128xbf16> to vector<32x128xf32>
    %43 = arith.addf %41, %42 : vector<32x128xf32>
    %cst_26 = arith.constant dense<0xFF800000> : vector<128xf32>
    %44 = vector.multi_reduction <maximumf>, %43, %cst_26 [0] : vector<32x128xf32> to vector<128xf32>
    %45 = vector.shape_cast %44 : vector<128xf32> to vector<1x128xf32>
    %46 = vector.broadcast %45 : vector<1x128xf32> to vector<32x128xf32>
    %47 = arith.subf %43, %46 : vector<32x128xf32>
    %48 = math.exp %47 : vector<32x128xf32>
    %cst_27 = arith.constant dense<0.000000e+00> : vector<128xf32>
    %49 = vector.multi_reduction <add>, %48, %cst_27 [0] : vector<32x128xf32> to vector<128xf32>
    %50 = vector.shape_cast %49 : vector<128xf32> to vector<1x128xf32>
    %51 = tpu.reciprocal %50 {approx = true} : vector<1x128xf32> -> vector<1x128xf32>
    %52 = vector.broadcast %51 : vector<1x128xf32> to vector<32x128xf32>
    %53 = arith.mulf %48, %52 : vector<32x128xf32>
    %54 = arith.truncf %53 : vector<32x128xf32> to vector<32x128xbf16>
    %cst_28 = arith.constant dense<0.000000e+00> : vector<8x128xf32>
    %55 = tpu.matmul %38, %54, %cst_28 {dimension_numbers = #tpu.dot_dimension_numbers<[1], [0], [0], [1], [0, 0, 1, 1], [], []>} : vector<8x32xbf16>, vector<32x128xbf16>, vector<8x128xf32> -> vector<8x128xf32>
    %56 = vector.extract_strided_slice %14 {offsets = [16, 0], sizes = [8, 128], strides = [1, 1]} : vector<32x128xbf16> to vector<8x128xbf16>
    %57 = vector.extract_strided_slice %15 {offsets = [16, 0], sizes = [8, 32], strides = [1, 1]} : vector<64x32xbf16> to vector<8x32xbf16>
    %58 = vector.extract_strided_slice %15 {offsets = [48, 0], sizes = [8, 32], strides = [1, 1]} : vector<64x32xbf16> to vector<8x32xbf16>
    %c0_29 = arith.constant 0 : index
    %c2 = arith.constant 2 : index
    %c0_30 = arith.constant 0 : index
    %c0_31 = arith.constant 0 : index
    %59 = vector.load %arg4[%c0_29, %c2, %c0_30, %c0_31] : memref<1x4x32x128xbf16, #tpu.memory_space<vmem>>, vector<1x1x32x128xbf16>
    %60 = vector.shape_cast %59 : vector<1x1x32x128xbf16> to vector<32x128xbf16>
    %cst_32 = arith.constant dense<0.000000e+00> : vector<32x128xf32>
    %61 = tpu.matmul %57, %56, %cst_32 {dimension_numbers = #tpu.dot_dimension_numbers<[0], [0], [1], [1], [0, 1, 1, 1], [], []>} : vector<8x32xbf16>, vector<8x128xbf16>, vector<32x128xf32> -> vector<32x128xf32>
    %62 = arith.extf %60 : vector<32x128xbf16> to vector<32x128xf32>
    %63 = arith.addf %61, %62 : vector<32x128xf32>
    %cst_33 = arith.constant dense<0xFF800000> : vector<128xf32>
    %64 = vector.multi_reduction <maximumf>, %63, %cst_33 [0] : vector<32x128xf32> to vector<128xf32>
    %65 = vector.shape_cast %64 : vector<128xf32> to vector<1x128xf32>
    %66 = vector.broadcast %65 : vector<1x128xf32> to vector<32x128xf32>
    %67 = arith.subf %63, %66 : vector<32x128xf32>
    %68 = math.exp %67 : vector<32x128xf32>
    %cst_34 = arith.constant dense<0.000000e+00> : vector<128xf32>
    %69 = vector.multi_reduction <add>, %68, %cst_34 [0] : vector<32x128xf32> to vector<128xf32>
    %70 = vector.shape_cast %69 : vector<128xf32> to vector<1x128xf32>
    %71 = tpu.reciprocal %70 {approx = true} : vector<1x128xf32> -> vector<1x128xf32>
    %72 = vector.broadcast %71 : vector<1x128xf32> to vector<32x128xf32>
    %73 = arith.mulf %68, %72 : vector<32x128xf32>
    %74 = arith.truncf %73 : vector<32x128xf32> to vector<32x128xbf16>
    %cst_35 = arith.constant dense<0.000000e+00> : vector<8x128xf32>
    %75 = tpu.matmul %58, %74, %cst_35 {dimension_numbers = #tpu.dot_dimension_numbers<[1], [0], [0], [1], [0, 0, 1, 1], [], []>} : vector<8x32xbf16>, vector<32x128xbf16>, vector<8x128xf32> -> vector<8x128xf32>
    %76 = vector.extract_strided_slice %14 {offsets = [24, 0], sizes = [8, 128], strides = [1, 1]} : vector<32x128xbf16> to vector<8x128xbf16>
    %77 = vector.extract_strided_slice %15 {offsets = [24, 0], sizes = [8, 32], strides = [1, 1]} : vector<64x32xbf16> to vector<8x32xbf16>
    %78 = vector.extract_strided_slice %15 {offsets = [56, 0], sizes = [8, 32], strides = [1, 1]} : vector<64x32xbf16> to vector<8x32xbf16>
    %c0_36 = arith.constant 0 : index
    %c3 = arith.constant 3 : index
    %c0_37 = arith.constant 0 : index
    %c0_38 = arith.constant 0 : index
    %79 = vector.load %arg4[%c0_36, %c3, %c0_37, %c0_38] : memref<1x4x32x128xbf16, #tpu.memory_space<vmem>>, vector<1x1x32x128xbf16>
    %80 = vector.shape_cast %79 : vector<1x1x32x128xbf16> to vector<32x128xbf16>
    %cst_39 = arith.constant dense<0.000000e+00> : vector<32x128xf32>
    %81 = tpu.matmul %77, %76, %cst_39 {dimension_numbers = #tpu.dot_dimension_numbers<[0], [0], [1], [1], [0, 1, 1, 1], [], []>} : vector<8x32xbf16>, vector<8x128xbf16>, vector<32x128xf32> -> vector<32x128xf32>
    %82 = arith.extf %80 : vector<32x128xbf16> to vector<32x128xf32>
    %83 = arith.addf %81, %82 : vector<32x128xf32>
    %cst_40 = arith.constant dense<0xFF800000> : vector<128xf32>
    %84 = vector.multi_reduction <maximumf>, %83, %cst_40 [0] : vector<32x128xf32> to vector<128xf32>
    %85 = vector.shape_cast %84 : vector<128xf32> to vector<1x128xf32>
    %86 = vector.broadcast %85 : vector<1x128xf32> to vector<32x128xf32>
    %87 = arith.subf %83, %86 : vector<32x128xf32>
    %88 = math.exp %87 : vector<32x128xf32>
    %cst_41 = arith.constant dense<0.000000e+00> : vector<128xf32>
    %89 = vector.multi_reduction <add>, %88, %cst_41 [0] : vector<32x128xf32> to vector<128xf32>
    %90 = vector.shape_cast %89 : vector<128xf32> to vector<1x128xf32>
    %91 = tpu.reciprocal %90 {approx = true} : vector<1x128xf32> -> vector<1x128xf32>
    %92 = vector.broadcast %91 : vector<1x128xf32> to vector<32x128xf32>
    %93 = arith.mulf %88, %92 : vector<32x128xf32>
    %94 = arith.truncf %93 : vector<32x128xf32> to vector<32x128xbf16>
    %cst_42 = arith.constant dense<0.000000e+00> : vector<8x128xf32>
    %95 = tpu.matmul %78, %94, %cst_42 {dimension_numbers = #tpu.dot_dimension_numbers<[1], [0], [0], [1], [0, 0, 1, 1], [], []>} : vector<8x32xbf16>, vector<32x128xbf16>, vector<8x128xf32> -> vector<8x128xf32>
    %96 = tpu.concatenate %35, %55, %75, %95 in 0 : vector<8x128xf32>, vector<8x128xf32>, vector<8x128xf32>, vector<8x128xf32> -> vector<32x128xf32>
    %97 = arith.truncf %96 : vector<32x128xf32> to vector<32x128xbf16>
    %c0_43 = arith.constant 0 : index
    %c0_44 = arith.constant 0 : index
    %98 = vector.load %arg9[%c0_43, %c0_44] : memref<32x32xbf16, #tpu.memory_space<vmem>>, vector<32x32xbf16>
    %cst_45 = arith.constant dense<0.000000e+00> : vector<32x128xf32>
    %99 = tpu.matmul %98, %97, %cst_45 {dimension_numbers = #tpu.dot_dimension_numbers<[1], [0], [0], [1], [0, 0, 1, 1], [], []>} : vector<32x32xbf16>, vector<32x128xbf16>, vector<32x128xf32> -> vector<32x128xf32>
    %c0_46 = arith.constant 0 : index
    %c0_47 = arith.constant 0 : index
    %100 = vector.load %arg10[%c0_46, %c0_47] : memref<32x1xf32, #tpu.memory_space<vmem>>, vector<32x1xf32>
    %101 = vector.broadcast %100 : vector<32x1xf32> to vector<32x128xf32>
    %102 = arith.addf %99, %101 : vector<32x128xf32>
    %c0_48 = arith.constant 0 : index
    %c0_49 = arith.constant 0 : index
    %c0_50 = arith.constant 0 : index
    %103 = vector.load %arg11[%c0_48, %c0_49, %c0_50] : memref<1x32x128xf32, #tpu.memory_space<vmem>>, vector<1x32x128xf32>
    %104 = vector.shape_cast %103 : vector<1x32x128xf32> to vector<32x128xf32>
    %105 = vector.shape_cast %102 : vector<32x128xf32> to vector<1x32x128xf32>
    tpu.vector_store %arg11[%c0_48, %c0_49, %c0_50], %105 {strides = array<i32>} : memref<1x32x128xf32, #tpu.memory_space<vmem>>, vector<1x32x128xf32>,
    return
  }
  func.func @transform_0(%arg0: i32, %arg1: i32) -> (i32, i32, i32) {
    %c0_i32 = arith.constant 0 : i32
    %c0_i32_0 = arith.constant 0 : i32
    return %arg0, %c0_i32, %arg1 : i32, i32, i32
  }
  func.func @transform_1(%arg0: i32, %arg1: i32) -> (i32, i32, i32) {
    %c0_i32 = arith.constant 0 : i32
    %c0_i32_0 = arith.constant 0 : i32
    %c0_i32_1 = arith.constant 0 : i32
    return %arg0, %c0_i32, %c0_i32_0 : i32, i32, i32
  }
  func.func @transform_2(%arg0: i32, %arg1: i32) -> (i32, i32, i32, i32) {
    %c0_i32 = arith.constant 0 : i32
    %c0_i32_0 = arith.constant 0 : i32
    %c0_i32_1 = arith.constant 0 : i32
    return %arg0, %c0_i32, %c0_i32_0, %arg1 : i32, i32, i32, i32
  }
  func.func @transform_3(%arg0: i32, %arg1: i32) -> (i32, i32) {
    %c0_i32 = arith.constant 0 : i32
    %c0_i32_0 = arith.constant 0 : i32
    %c0_i32_1 = arith.constant 0 : i32
    return %c0_i32, %c0_i32_0 : i32, i32
  }
  func.func @transform_4(%arg0: i32, %arg1: i32) -> (i32, i32) {
    %c0_i32 = arith.constant 0 : i32
    %c0_i32_0 = arith.constant 0 : i32
    %c0_i32_1 = arith.constant 0 : i32
    return %c0_i32, %c0_i32_0 : i32, i32
  }
  func.func @transform_5(%arg0: i32, %arg1: i32) -> (i32, i32) {
    %c0_i32 = arith.constant 0 : i32
    %c0_i32_0 = arith.constant 0 : i32
    %c0_i32_1 = arith.constant 0 : i32
    return %c0_i32, %c0_i32_0 : i32, i32
  }
  func.func @transform_6(%arg0: i32, %arg1: i32) -> (i32, i32) {
    %c0_i32 = arith.constant 0 : i32
    %c0_i32_0 = arith.constant 0 : i32
    %c0_i32_1 = arith.constant 0 : i32
    return %c0_i32, %c0_i32_0 : i32, i32
  }
  func.func @transform_7(%arg0: i32, %arg1: i32) -> (i32, i32) {
    %c0_i32 = arith.constant 0 : i32
    %c0_i32_0 = arith.constant 0 : i32
    %c0_i32_1 = arith.constant 0 : i32
    return %c0_i32, %c0_i32_0 : i32, i32
  }
  func.func @transform_8(%arg0: i32, %arg1: i32) -> (i32, i32) {
    %c0_i32 = arith.constant 0 : i32
    %c0_i32_0 = arith.constant 0 : i32
    %c0_i32_1 = arith.constant 0 : i32
    return %c0_i32, %c0_i32_0 : i32, i32
  }
  func.func @transform_9(%arg0: i32, %arg1: i32) -> (i32, i32, i32) {
    %c0_i32 = arith.constant 0 : i32
    %c0_i32_0 = arith.constant 0 : i32
    return %arg0, %c0_i32, %arg1 : i32, i32, i32
  }
}

</mosaic_0001>

<llo_original>
// kernel: tpu_custom_call.1
$region0: #{tpu_custom_call.1}
  #allocation0 [shape = 'u32[]', space=smem, size = 0x4, offset = 0x4, fixed_abs, tag = 'smem constant byte address 0x4 - core index']
  #allocation1 [shape = 'u32[72,128]{1,0:T(1,128)}', space=vmem, size = 0x9000, scoped, tag = 'internal scratch']
  %s0 = inlined_call_operand.hbm [shape: f32[8,128], index: 0, kind: input, shape index: {}]
  %s1 = inlined_call_operand.hbm [shape: f32[8,128], index: 1, kind: output, shape index: {}]
  %s2 = sld [smem:[#allocation0]]
  $region41: #{tpu_custom_call.1} parent=0
    _
  %s4 = ssub.s32 1, %s2
  %s5 = scalar_select 0, %s4, %s2
  $region1: #{tpu_custom_call.1} parent=0
    #allocation2 [shape = 'u8[4096]{0}', space=vmem, size = 0x1000, scoped, tag = 'input window, operand 0, single buffered']
    #allocation3 [shape = 's32[2]{0}', space=sflag, size = 0x8, scoped, tag = 'scoped memory for tpu_custom_call.1']
    #allocation4 [shape = 's32[2]{0}', space=sflag, size = 0x8, scoped, tag = 'scoped memory for tpu_custom_call.1']
    #allocation5 [shape = 'u8[4096]{0}', space=vmem, size = 0x1000, scoped, tag = 'output window, operand 0, single buffered']
    %6 = vsyncpa [#allocation3], 0
    %7 = vsyncpa [#allocation4], 0
    loop: start=0, step=1, limit=4
    $region2: #{tpu_custom_call.1} parent=1 // loop_pre_header
      _
    $region3: #{tpu_custom_call.1} parent=1 // loop_header
      %s9 = sphi 0, %s13
      %p10 = scmp.ge.s32.totalorder %s9, 4
      %s17 = sphi 0, %s17
      %s19 = sphi 0, %s17
      %s20 = sphi 0, %s19
      %s34 = sphi 0, %s20
      %s38 = sphi 0, %s38
      %s40 = sphi 0, %s38
      %s41 = sphi 0, %s40
      %s55 = sphi 0, %s41
    $region4: #{tpu_custom_call.1} parent=1 // loop_header_branch
      %12 = sbr.rel (%p10) target = $region8
    $region5: #{tpu_custom_call.1} parent=1 // loop_body
      %s14 = ssub.s32 %s9, 1
      %s15 = ssub.s32 %s9, 2
      %s16 = sadd.s32 %s9, 1
      %s18 = sadd.s32 %s17, 1
      %p21 = scmp.eq.s32.totalorder %s9, 1
      %p22 = scmp.ne.s32.totalorder %s17, %s19
      %p23 = scmp.eq.s32.totalorder %s9, 0
      %p24 = por %p22, %p23
      %p25 = scmp.ne.s32.totalorder %s17, %s19
      %p26 = scmp.eq.s32.totalorder %s14, 1
      %p27 = por %p25, %p26
      %p28 = scmp.ne.s32.totalorder %s19, %s20
      %p29 = scmp.eq.s32.totalorder %s14, 0
      %p30 = por %p28, %p29
      %p31 = scmp.ne.s32.totalorder %s19, %s20
      %p32 = scmp.eq.s32.totalorder %s15, 1
      %p33 = por %p31, %p32
      %p35 = scmp.ne.s32.totalorder %s20, %s34
      %p36 = scmp.eq.s32.totalorder %s15, 0
      %p37 = por %p35, %p36
      %s39 = sadd.s32 %s38, 1
      %p42 = scmp.eq.s32.totalorder %s9, 1
      %p43 = scmp.ne.s32.totalorder %s38, %s40
      %p44 = scmp.eq.s32.totalorder %s9, 0
      %p45 = por %p43, %p44
      %p46 = scmp.ne.s32.totalorder %s38, %s40
      %p47 = scmp.eq.s32.totalorder %s14, 1
      %p48 = por %p46, %p47
      %p49 = scmp.ne.s32.totalorder %s40, %s41
      %p50 = scmp.eq.s32.totalorder %s14, 0
      %p51 = por %p49, %p50
      %p52 = scmp.ne.s32.totalorder %s40, %s41
      %p53 = scmp.eq.s32.totalorder %s15, 1
      %p54 = por %p52, %p53
      %p56 = scmp.ne.s32.totalorder %s41, %s55
      %p57 = scmp.eq.s32.totalorder %s15, 0
      %p58 = por %p56, %p57
      %p59 = scmp.le.s32.totalorder 1, %s9
      %p60 = scmp.lt.s32.totalorder %s9, 3
      %p61 = pnand %p59, %p60
      %p62 = pneg %p61
      // Predicated region
      $region9: #{tpu_custom_call.1} parent=5 // pred_check
        _
      $region10: #{tpu_custom_call.1} parent=5 // pred_check_branch
        %64 = sbr.rel (%p61) target = $region12
      $region11: #{tpu_custom_call.1} parent=5 // pred_region
        %s65 = ssub.s32 %s9, 1
        // Predicated region
        $region13: #{tpu_custom_call.1} parent=11 // pred_check
          %p66 = pneg %p30
        $region14: #{tpu_custom_call.1} parent=11 // pred_check_branch
          %68 = sbr.rel (%p66) target = $region16
        $region15: #{tpu_custom_call.1} parent=11 // pred_region
          %70 = vsyncadd [#allocation3], 0
          %s72 = sshll.u32 %s0, 4
          %s73 = int_to_ptr.hbm [resolvable:$true] %s72
          %s74 = sshll.u32 [#allocation2], 4
          %s75 = int_to_ptr.vmem [resolvable:$true] %s74
          %77 = dma.hbm_to_vmem [thread:$0]  %s73, 128, %s75, [#allocation3]
        $region16: #{tpu_custom_call.1} parent=11 // pred_fallthru
          _
      $region12: #{tpu_custom_call.1} parent=5 // pred_fallthru
        _
      %p78 = scmp.lt.s32.totalorder %s9, 2
      // Predicated region
      $region17: #{tpu_custom_call.1} parent=5 // pred_check
        %p79 = pneg %p78
      $region18: #{tpu_custom_call.1} parent=5 // pred_check_branch
        %81 = sbr.rel (%p79) target = $region20
      $region19: #{tpu_custom_call.1} parent=5 // pred_region
        _
      $region20: #{tpu_custom_call.1} parent=5 // pred_fallthru
        _
      %p82 = scmp.le.s32.totalorder 1, %s9
      %p83 = scmp.lt.s32.totalorder %s9, 3
      %p84 = pnand %p82, %p83
      %p85 = pneg %p84
      // Predicated region
      $region21: #{tpu_custom_call.1} parent=5 // pred_check
        _
      $region22: #{tpu_custom_call.1} parent=5 // pred_check_branch
        %87 = sbr.rel (%p84) target = $region24
      $region23: #{tpu_custom_call.1} parent=5 // pred_region
        %s88 = ssub.s32 %s9, 1
        // Predicated region
        $region25: #{tpu_custom_call.1} parent=23 // pred_check
          %p89 = pneg %p30
        $region26: #{tpu_custom_call.1} parent=23 // pred_check_branch
          %91 = sbr.rel (%p89) target = $region28
        $region27: #{tpu_custom_call.1} parent=23 // pred_region
          %93 = dma.done [#allocation3], 128
        $region28: #{tpu_custom_call.1} parent=23 // pred_fallthru
          _
        %p94 = pneg %p30
        %p95 = pneg %p27
        %p96 = pneg %p51
        %p97 = pneg %p48
        %v98 = vld [vmem:[#allocation2] sm:$0xff]
        %v99 = vadd.f32 %v98, 1.0
        %100 = vst [vmem:[#allocation5] sm:$0xff] %v99
        // Predicated region
        $region29: #{tpu_custom_call.1} parent=23 // pred_check
          %p101 = pneg %p48
        $region30: #{tpu_custom_call.1} parent=23 // pred_check_branch
          %103 = sbr.rel (%p101) target = $region32
        $region31: #{tpu_custom_call.1} parent=23 // pred_region
          %105 = vsyncadd [#allocation4], 0
          %s107 = sshll.u32 [#allocation5], 4
          %s108 = int_to_ptr.vmem [resolvable:$true] %s107
          %s109 = sshll.u32 %s1, 4
          %s110 = int_to_ptr.hbm [resolvable:$true] %s109
          %112 = dma.vmem_to_hbm [thread:$0]  %s108, 128, %s110, [#allocation4]
        $region32: #{tpu_custom_call.1} parent=23 // pred_fallthru
          _
        // Predicated region
        $region33: #{tpu_custom_call.1} parent=23 // pred_check
          %p113 = pneg %p48
        $region34: #{tpu_custom_call.1} parent=23 // pred_check_branch
          %115 = sbr.rel (%p113) target = $region36
        $region35: #{tpu_custom_call.1} parent=23 // pred_region
          %117 = dma.done [#allocation4], 128
        $region36: #{tpu_custom_call.1} parent=23 // pred_fallthru
          _
      $region24: #{tpu_custom_call.1} parent=5 // pred_fallthru
        _
      %p118 = scmp.le.s32.totalorder 2, %s9
      // Predicated region
      $region37: #{tpu_custom_call.1} parent=5 // pred_check
        %p119 = pneg %p118
      $region38: #{tpu_custom_call.1} parent=5 // pred_check_branch
        %121 = sbr.rel (%p119) target = $region40
      $region39: #{tpu_custom_call.1} parent=5 // pred_region
        %s122 = ssub.s32 %s9, 2
      $region40: #{tpu_custom_call.1} parent=5 // pred_fallthru
        _
    $region6: #{tpu_custom_call.1} parent=1 // loop_footer
      %s13 = sadd.s32 1, %s9
    $region7: #{tpu_custom_call.1} parent=1 // loop_footer_branch
      %8 = sbr.rel target = $region3
    $region8: #{tpu_custom_call.1} parent=1 // loop_exit
      _
    %123 = vsyncpa [#allocation3], 1
    %s124 = scalar_lea.sflag [#allocation3], 1
    %125 = vsyncpa %s124, 1
    %126 = vsyncpa [#allocation4], 1
    %s127 = scalar_lea.sflag [#allocation4], 1
    %128 = vsyncpa %s127, 1

// kernel: d_attention_fuse_forward.1
$region0: #{d_attention_fuse_forward.1}
  #allocation0 [shape = 'u32[]', space=smem, size = 0x4, offset = 0x4, fixed_abs, tag = 'smem constant byte address 0x4 - core index']
  #allocation1 [shape = 'u32[72,128]{1,0:T(1,128)}', space=vmem, size = 0x9000, scoped, tag = 'internal scratch']
  %s0 = inlined_call_operand.vmem [shape: bf16[2,32,128], index: 0, kind: input, shape index: {}]
  %s1 = inlined_call_operand.vmem [shape: bf16[2,32,32], index: 1, kind: input, shape index: {}]
  %s2 = inlined_call_operand.vmem [shape: bf16[2,4,32,128], index: 2, kind: input, shape index: {}]
  %s3 = inlined_call_operand.vmem [shape: bf16[32,32], index: 3, kind: input, shape index: {}]
  %s4 = inlined_call_operand.vmem [shape: f32[32,1], index: 4, kind: input, shape index: {}]
  %s5 = inlined_call_operand.vmem [shape: bf16[64,32], index: 5, kind: input, shape index: {}]
  %s6 = inlined_call_operand.vmem [shape: f32[64,1], index: 6, kind: input, shape index: {}]
  %s7 = inlined_call_operand.vmem [shape: bf16[32,32], index: 7, kind: input, shape index: {}]
  %s8 = inlined_call_operand.vmem [shape: f32[32,1], index: 8, kind: input, shape index: {}]
  %s9 = inlined_call_operand.vmem [shape: f32[2,32,128], index: 9, kind: output, shape index: {}]
  %s10 = sld [smem:[#allocation0]]
  $region69: #{d_attention_fuse_forward.1} parent=0
    _
  %s12 = ssub.s32 1, %s10
  %s13 = scalar_select 0, %s12, %s10
  loop: start=0, step=1, limit=4
  $region2: #{d_attention_fuse_forward.1} parent=0 // loop_pre_header
    _
  $region3: #{d_attention_fuse_forward.1} parent=0 // loop_header
    %s15 = sphi 0, %s19
    %p16 = scmp.ge.s32.totalorder %s15, 4
    %s22 = sphi 0, %s34
    %s23 = sphi 0, %s30
    %s24 = sphi 0, %s22
    %s25 = sphi 0, %s23
    %s26 = sphi 0, %s24
    %s27 = sphi 0, %s25
    %s39 = sphi 0, %s41
    %s42 = sphi 0, %s39
    %s43 = sphi 0, %s42
    %s59 = sphi 0, %s43
    %s65 = sphi 0, %s67
    %s68 = sphi 0, %s65
    %s69 = sphi 0, %s68
    %s85 = sphi 0, %s69
    %s93 = sphi 0, %s95
    %s96 = sphi 0, %s93
    %s97 = sphi 0, %s96
    %s113 = sphi 0, %s97
    %s117 = sphi 0, %s117
    %s119 = sphi 0, %s117
    %s120 = sphi 0, %s119
    %s134 = sphi 0, %s120
    %s138 = sphi 0, %s138
    %s140 = sphi 0, %s138
    %s141 = sphi 0, %s140
    %s155 = sphi 0, %s141
    %s159 = sphi 0, %s159
    %s161 = sphi 0, %s159
    %s162 = sphi 0, %s161
    %s176 = sphi 0, %s162
    %s180 = sphi 0, %s180
    %s182 = sphi 0, %s180
    %s183 = sphi 0, %s182
    %s197 = sphi 0, %s183
    %s201 = sphi 0, %s201
    %s203 = sphi 0, %s201
    %s204 = sphi 0, %s203
    %s218 = sphi 0, %s204
    %s222 = sphi 0, %s222
    %s224 = sphi 0, %s222
    %s225 = sphi 0, %s224
    %s239 = sphi 0, %s225
    %s247 = sphi 0, %s249
    %s250 = sphi 0, %s247
    %s251 = sphi 0, %s250
    %s267 = sphi 0, %s251
  $region4: #{d_attention_fuse_forward.1} parent=0 // loop_header_branch
    %18 = sbr.rel (%p16) target = $region8
  $region5: #{d_attention_fuse_forward.1} parent=0 // loop_body
    %s20 = ssub.s32 %s15, 1
    %s21 = ssub.s32 %s15, 2
    %s28 = sadd.s32 1, %s23
    %p29 = scmp.ge.s32.totalorder %s28, 1
    %s30 = scalar_select %p29, 0, %s28
    %s31 = sadd.s32 1, %s22
    %s32 = scalar_select %p29, %s31, %s22
    %p33 = scmp.ge.s32.totalorder %s32, 2
    %s34 = scalar_select %p33, 0, %s32
    %s35 = ssub.s32 %s22, %s34
    %s36 = ssub.s32 %s23, %s30
    %s37 = sor.u32 %s35, %s36
    %p38 = scmp.eq.s32.totalorder %s37, 0
    %s40 = sadd.s32 %s39, 1
    %s41 = scalar_select %p38, %s39, %s40
    %p44 = pneg %p38
    %p45 = scmp.eq.s32.totalorder %s15, 1
    %p46 = por %p44, %p45
    %p47 = scmp.ne.s32.totalorder %s39, %s42
    %p48 = scmp.eq.s32.totalorder %s15, 0
    %p49 = por %p47, %p48
    %p50 = scmp.ne.s32.totalorder %s39, %s42
    %p51 = scmp.eq.s32.totalorder %s20, 1
    %p52 = por %p50, %p51
    %p53 = scmp.ne.s32.totalorder %s42, %s43
    %p54 = scmp.eq.s32.totalorder %s20, 0
    %p55 = por %p53, %p54
    %p56 = scmp.ne.s32.totalorder %s42, %s43
    %p57 = scmp.eq.s32.totalorder %s21, 1
    %p58 = por %p56, %p57
    %p60 = scmp.ne.s32.totalorder %s43, %s59
    %p61 = scmp.eq.s32.totalorder %s21, 0
    %p62 = por %p60, %p61
    %s63 = ssub.s32 %s22, %s34
    %p64 = scmp.eq.s32.totalorder %s63, 0
    %s66 = sadd.s32 %s65, 1
    %s67 = scalar_select %p64, %s65, %s66
    %p70 = pneg %p64
    %p71 = scmp.eq.s32.totalorder %s15, 1
    %p72 = por %p70, %p71
    %p73 = scmp.ne.s32.totalorder %s65, %s68
    %p74 = scmp.eq.s32.totalorder %s15, 0
    %p75 = por %p73, %p74
    %p76 = scmp.ne.s32.totalorder %s65, %s68
    %p77 = scmp.eq.s32.totalorder %s20, 1
    %p78 = por %p76, %p77
    %p79 = scmp.ne.s32.totalorder %s68, %s69
    %p80 = scmp.eq.s32.totalorder %s20, 0
    %p81 = por %p79, %p80
    %p82 = scmp.ne.s32.totalorder %s68, %s69
    %p83 = scmp.eq.s32.totalorder %s21, 1
    %p84 = por %p82, %p83
    %p86 = scmp.ne.s32.totalorder %s69, %s85
    %p87 = scmp.eq.s32.totalorder %s21, 0
    %p88 = por %p86, %p87
    %s89 = ssub.s32 %s22, %s34
    %s90 = ssub.s32 %s23, %s30
    %s91 = sor.u32 %s89, %s90
    %p92 = scmp.eq.s32.totalorder %s91, 0
    %s94 = sadd.s32 %s93, 1
    %s95 = scalar_select %p92, %s93, %s94
    %p98 = pneg %p92
    %p99 = scmp.eq.s32.totalorder %s15, 1
    %p100 = por %p98, %p99
    %p101 = scmp.ne.s32.totalorder %s93, %s96
    %p102 = scmp.eq.s32.totalorder %s15, 0
    %p103 = por %p101, %p102
    %p104 = scmp.ne.s32.totalorder %s93, %s96
    %p105 = scmp.eq.s32.totalorder %s20, 1
    %p106 = por %p104, %p105
    %p107 = scmp.ne.s32.totalorder %s96, %s97
    %p108 = scmp.eq.s32.totalorder %s20, 0
    %p109 = por %p107, %p108
    %p110 = scmp.ne.s32.totalorder %s96, %s97
    %p111 = scmp.eq.s32.totalorder %s21, 1
    %p112 = por %p110, %p111
    %p114 = scmp.ne.s32.totalorder %s97, %s113
    %p115 = scmp.eq.s32.totalorder %s21, 0
    %p116 = por %p114, %p115
    %s118 = sadd.s32 %s117, 1
    %p121 = scmp.eq.s32.totalorder %s15, 1
    %p122 = scmp.ne.s32.totalorder %s117, %s119
    %p123 = scmp.eq.s32.totalorder %s15, 0
    %p124 = por %p122, %p123
    %p125 = scmp.ne.s32.totalorder %s117, %s119
    %p126 = scmp.eq.s32.totalorder %s20, 1
    %p127 = por %p125, %p126
    %p128 = scmp.ne.s32.totalorder %s119, %s120
    %p129 = scmp.eq.s32.totalorder %s20, 0
    %p130 = por %p128, %p129
    %p131 = scmp.ne.s32.totalorder %s119, %s120
    %p132 = scmp.eq.s32.totalorder %s21, 1
    %p133 = por %p131, %p132
    %p135 = scmp.ne.s32.totalorder %s120, %s134
    %p136 = scmp.eq.s32.totalorder %s21, 0
    %p137 = por %p135, %p136
    %s139 = sadd.s32 %s138, 1
    %p142 = scmp.eq.s32.totalorder %s15, 1
    %p143 = scmp.ne.s32.totalorder %s138, %s140
    %p144 = scmp.eq.s32.totalorder %s15, 0
    %p145 = por %p143, %p144
    %p146 = scmp.ne.s32.totalorder %s138, %s140
    %p147 = scmp.eq.s32.totalorder %s20, 1
    %p148 = por %p146, %p147
    %p149 = scmp.ne.s32.totalorder %s140, %s141
    %p150 = scmp.eq.s32.totalorder %s20, 0
    %p151 = por %p149, %p150
    %p152 = scmp.ne.s32.totalorder %s140, %s141
    %p153 = scmp.eq.s32.totalorder %s21, 1
    %p154 = por %p152, %p153
    %p156 = scmp.ne.s32.totalorder %s141, %s155
    %p157 = scmp.eq.s32.totalorder %s21, 0
    %p158 = por %p156, %p157
    %s160 = sadd.s32 %s159, 1
    %p163 = scmp.eq.s32.totalorder %s15, 1
    %p164 = scmp.ne.s32.totalorder %s159, %s161
    %p165 = scmp.eq.s32.totalorder %s15, 0
    %p166 = por %p164, %p165
    %p167 = scmp.ne.s32.totalorder %s159, %s161
    %p168 = scmp.eq.s32.totalorder %s20, 1
    %p169 = por %p167, %p168
    %p170 = scmp.ne.s32.totalorder %s161, %s162
    %p171 = scmp.eq.s32.totalorder %s20, 0
    %p172 = por %p170, %p171
    %p173 = scmp.ne.s32.totalorder %s161, %s162
    %p174 = scmp.eq.s32.totalorder %s21, 1
    %p175 = por %p173, %p174
    %p177 = scmp.ne.s32.totalorder %s162, %s176
    %p178 = scmp.eq.s32.totalorder %s21, 0
    %p179 = por %p177, %p178
    %s181 = sadd.s32 %s180, 1
    %p184 = scmp.eq.s32.totalorder %s15, 1
    %p185 = scmp.ne.s32.totalorder %s180, %s182
    %p186 = scmp.eq.s32.totalorder %s15, 0
    %p187 = por %p185, %p186
    %p188 = scmp.ne.s32.totalorder %s180, %s182
    %p189 = scmp.eq.s32.totalorder %s20, 1
    %p190 = por %p188, %p189
    %p191 = scmp.ne.s32.totalorder %s182, %s183
    %p192 = scmp.eq.s32.totalorder %s20, 0
    %p193 = por %p191, %p192
    %p194 = scmp.ne.s32.totalorder %s182, %s183
    %p195 = scmp.eq.s32.totalorder %s21, 1
    %p196 = por %p194, %p195
    %p198 = scmp.ne.s32.totalorder %s183, %s197
    %p199 = scmp.eq.s32.totalorder %s21, 0
    %p200 = por %p198, %p199
    %s202 = sadd.s32 %s201, 1
    %p205 = scmp.eq.s32.totalorder %s15, 1
    %p206 = scmp.ne.s32.totalorder %s201, %s203
    %p207 = scmp.eq.s32.totalorder %s15, 0
    %p208 = por %p206, %p207
    %p209 = scmp.ne.s32.totalorder %s201, %s203
    %p210 = scmp.eq.s32.totalorder %s20, 1
    %p211 = por %p209, %p210
    %p212 = scmp.ne.s32.totalorder %s203, %s204
    %p213 = scmp.eq.s32.totalorder %s20, 0
    %p214 = por %p212, %p213
    %p215 = scmp.ne.s32.totalorder %s203, %s204
    %p216 = scmp.eq.s32.totalorder %s21, 1
    %p217 = por %p215, %p216
    %p219 = scmp.ne.s32.totalorder %s204, %s218
    %p220 = scmp.eq.s32.totalorder %s21, 0
    %p221 = por %p219, %p220
    %s223 = sadd.s32 %s222, 1
    %p226 = scmp.eq.s32.totalorder %s15, 1
    %p227 = scmp.ne.s32.totalorder %s222, %s224
    %p228 = scmp.eq.s32.totalorder %s15, 0
    %p229 = por %p227, %p228
    %p230 = scmp.ne.s32.totalorder %s222, %s224
    %p231 = scmp.eq.s32.totalorder %s20, 1
    %p232 = por %p230, %p231
    %p233 = scmp.ne.s32.totalorder %s224, %s225
    %p234 = scmp.eq.s32.totalorder %s20, 0
    %p235 = por %p233, %p234
    %p236 = scmp.ne.s32.totalorder %s224, %s225
    %p237 = scmp.eq.s32.totalorder %s21, 1
    %p238 = por %p236, %p237
    %p240 = scmp.ne.s32.totalorder %s225, %s239
    %p241 = scmp.eq.s32.totalorder %s21, 0
    %p242 = por %p240, %p241
    %s243 = ssub.s32 %s22, %s34
    %s244 = ssub.s32 %s23, %s30
    %s245 = sor.u32 %s243, %s244
    %p246 = scmp.eq.s32.totalorder %s245, 0
    %s248 = sadd.s32 %s247, 1
    %s249 = scalar_select %p246, %s247, %s248
    %p252 = pneg %p246
    %p253 = scmp.eq.s32.totalorder %s15, 1
    %p254 = por %p252, %p253
    %p255 = scmp.ne.s32.totalorder %s247, %s250
    %p256 = scmp.eq.s32.totalorder %s15, 0
    %p257 = por %p255, %p256
    %p258 = scmp.ne.s32.totalorder %s247, %s250
    %p259 = scmp.eq.s32.totalorder %s20, 1
    %p260 = por %p258, %p259
    %p261 = scmp.ne.s32.totalorder %s250, %s251
    %p262 = scmp.eq.s32.totalorder %s20, 0
    %p263 = por %p261, %p262
    %p264 = scmp.ne.s32.totalorder %s250, %s251
    %p265 = scmp.eq.s32.totalorder %s21, 1
    %p266 = por %p264, %p265
    %p268 = scmp.ne.s32.totalorder %s251, %s267
    %p269 = scmp.eq.s32.totalorder %s21, 0
    %p270 = por %p268, %p269
    %p271 = scmp.le.s32.totalorder 1, %s15
    %p272 = scmp.lt.s32.totalorder %s15, 3
    %p273 = pnand %p271, %p272
    %p274 = pneg %p273
    // Predicated region
    $region9: #{d_attention_fuse_forward.1} parent=5 // pred_check
      _
    $region10: #{d_attention_fuse_forward.1} parent=5 // pred_check_branch
      %276 = sbr.rel (%p273) target = $region12
    $region11: #{d_attention_fuse_forward.1} parent=5 // pred_region
      %s277 = ssub.s32 %s15, 1
      // Predicated region
      $region13: #{d_attention_fuse_forward.1} parent=11 // pred_check
        %p278 = pneg %p130
      $region14: #{d_attention_fuse_forward.1} parent=11 // pred_check_branch
        %280 = sbr.rel (%p278) target = $region16
      $region15: #{d_attention_fuse_forward.1} parent=11 // pred_region
        _
      $region16: #{d_attention_fuse_forward.1} parent=11 // pred_fallthru
        _
      // Predicated region
      $region17: #{d_attention_fuse_forward.1} parent=11 // pred_check
        %p281 = pneg %p151
      $region18: #{d_attention_fuse_forward.1} parent=11 // pred_check_branch
        %283 = sbr.rel (%p281) target = $region20
      $region19: #{d_attention_fuse_forward.1} parent=11 // pred_region
        _
      $region20: #{d_attention_fuse_forward.1} parent=11 // pred_fallthru
        _
      // Predicated region
      $region21: #{d_attention_fuse_forward.1} parent=11 // pred_check
        %p284 = pneg %p172
      $region22: #{d_attention_fuse_forward.1} parent=11 // pred_check_branch
        %286 = sbr.rel (%p284) target = $region24
      $region23: #{d_attention_fuse_forward.1} parent=11 // pred_region
        _
      $region24: #{d_attention_fuse_forward.1} parent=11 // pred_fallthru
        _
      // Predicated region
      $region25: #{d_attention_fuse_forward.1} parent=11 // pred_check
        %p287 = pneg %p193
      $region26: #{d_attention_fuse_forward.1} parent=11 // pred_check_branch
        %289 = sbr.rel (%p287) target = $region28
      $region27: #{d_attention_fuse_forward.1} parent=11 // pred_region
        _
      $region28: #{d_attention_fuse_forward.1} parent=11 // pred_fallthru
        _
      // Predicated region
      $region29: #{d_attention_fuse_forward.1} parent=11 // pred_check
        %p290 = pneg %p214
      $region30: #{d_attention_fuse_forward.1} parent=11 // pred_check_branch
        %292 = sbr.rel (%p290) target = $region32
      $region31: #{d_attention_fuse_forward.1} parent=11 // pred_region
        _
      $region32: #{d_attention_fuse_forward.1} parent=11 // pred_fallthru
        _
      // Predicated region
      $region33: #{d_attention_fuse_forward.1} parent=11 // pred_check
        %p293 = pneg %p235
      $region34: #{d_attention_fuse_forward.1} parent=11 // pred_check_branch
        %295 = sbr.rel (%p293) target = $region36
      $region35: #{d_attention_fuse_forward.1} parent=11 // pred_region
        _
      $region36: #{d_attention_fuse_forward.1} parent=11 // pred_fallthru
        _
    $region12: #{d_attention_fuse_forward.1} parent=5 // pred_fallthru
      _
    %p296 = scmp.lt.s32.totalorder %s15, 2
    // Predicated region
    $region37: #{d_attention_fuse_forward.1} parent=5 // pred_check
      %p297 = pneg %p296
    $region38: #{d_attention_fuse_forward.1} parent=5 // pred_check_branch
      %299 = sbr.rel (%p297) target = $region40
    $region39: #{d_attention_fuse_forward.1} parent=5 // pred_region
      // Predicated region
      $region41: #{d_attention_fuse_forward.1} parent=39 // pred_check
        %p300 = pneg %p49
      $region42: #{d_attention_fuse_forward.1} parent=39 // pred_check_branch
        %302 = sbr.rel (%p300) target = $region44
      $region43: #{d_attention_fuse_forward.1} parent=39 // pred_region
        %p303 = scmp.lt.s32.totalorder %s22, 1
        %s304 = scalar_select %p303, %s22, 1
        %p305 = scmp.lt.s32.totalorder %s23, 0
        %s306 = scalar_select %p305, %s23, 0
        %s307 = smul.addr %s304, 4
        %s308 = sadd.s32 %s306, %s307
        %s309 = smul.addr %s308, 4
        %s310 = scalar_lea.vmem %s0, %s309
      $region44: #{d_attention_fuse_forward.1} parent=39 // pred_fallthru
        _
      // Predicated region
      $region45: #{d_attention_fuse_forward.1} parent=39 // pred_check
        %p311 = pneg %p75
      $region46: #{d_attention_fuse_forward.1} parent=39 // pred_check_branch
        %313 = sbr.rel (%p311) target = $region48
      $region47: #{d_attention_fuse_forward.1} parent=39 // pred_region
        %p314 = scmp.lt.s32.totalorder %s22, 1
        %s315 = scalar_select %p314, %s22, 1
        %s316 = smul.addr %s315, 4
        %s317 = smul.addr %s316, 4
        %s318 = scalar_lea.vmem %s1, %s317
      $region48: #{d_attention_fuse_forward.1} parent=39 // pred_fallthru
        _
      // Predicated region
      $region49: #{d_attention_fuse_forward.1} parent=39 // pred_check
        %p319 = pneg %p103
      $region50: #{d_attention_fuse_forward.1} parent=39 // pred_check_branch
        %321 = sbr.rel (%p319) target = $region52
      $region51: #{d_attention_fuse_forward.1} parent=39 // pred_region
        %p322 = scmp.lt.s32.totalorder %s22, 1
        %s323 = scalar_select %p322, %s22, 1
        %p324 = scmp.lt.s32.totalorder %s23, 0
        %s325 = scalar_select %p324, %s23, 0
        %s326 = smul.addr %s323, 16
        %s327 = sadd.s32 %s325, %s326
        %s328 = smul.addr %s327, 4
        %s329 = scalar_lea.vmem %s2, %s328
      $region52: #{d_attention_fuse_forward.1} parent=39 // pred_fallthru
        _
    $region40: #{d_attention_fuse_forward.1} parent=5 // pred_fallthru
      _
    %p330 = scmp.le.s32.totalorder 1, %s15
    %p331 = scmp.lt.s32.totalorder %s15, 3
    %p332 = pnand %p330, %p331
    %p333 = pneg %p332
    // Predicated region
    $region53: #{d_attention_fuse_forward.1} parent=5 // pred_check
      _
    $region54: #{d_attention_fuse_forward.1} parent=5 // pred_check_branch
      %335 = sbr.rel (%p332) target = $region56
    $region55: #{d_attention_fuse_forward.1} parent=5 // pred_region
      %s336 = ssub.s32 %s15, 1
      %p337 = scmp.lt.s32.totalorder %s24, 1
      %s338 = scalar_select %p337, %s24, 1
      %p339 = scmp.lt.s32.totalorder %s25, 0
      %s340 = scalar_select %p339, %s25, 0
      %s341 = smul.addr %s338, 4
      %s342 = sadd.s32 %s340, %s341
      %s343 = smul.addr %s342, 4
      %s344 = scalar_lea.vmem %s0, %s343
      %p345 = pneg %p55
      %p346 = pneg %p52
      %p347 = scmp.lt.s32.totalorder %s24, 1
      %s348 = scalar_select %p347, %s24, 1
      %s349 = smul.addr %s348, 4
      %s350 = smul.addr %s349, 4
      %s351 = scalar_lea.vmem %s1, %s350
      %p352 = pneg %p81
      %p353 = pneg %p78
      %p354 = scmp.lt.s32.totalorder %s24, 1
      %s355 = scalar_select %p354, %s24, 1
      %p356 = scmp.lt.s32.totalorder %s25, 0
      %s357 = scalar_select %p356, %s25, 0
      %s358 = smul.addr %s355, 16
      %s359 = sadd.s32 %s357, %s358
      %s360 = smul.addr %s359, 4
      %s361 = scalar_lea.vmem %s2, %s360
      %p362 = pneg %p109
      %p363 = pneg %p106
      %p364 = pneg %p130
      %p365 = pneg %p127
      %p366 = pneg %p151
      %p367 = pneg %p148
      %p368 = pneg %p172
      %p369 = pneg %p169
      %p370 = pneg %p193
      %p371 = pneg %p190
      %p372 = pneg %p214
      %p373 = pneg %p211
      %p374 = pneg %p235
      %p375 = pneg %p232
      %p376 = pneg %p263
      %p377 = pneg %p260
      %p378 = scmp.lt.s32.totalorder %s24, 1
      %s379 = scalar_select %p378, %s24, 1
      %p380 = scmp.lt.s32.totalorder %s25, 0
      %s381 = scalar_select %p380, %s25, 0
      %s382 = smul.addr %s379, 4
      %s383 = sadd.s32 %s381, %s382
      %s384 = smul.addr %s383, 8
      %s385 = scalar_lea.vmem %s9, %s384
      %p386 = scmp.lt.s32.totalorder %s24, 1
      %s387 = scalar_select %p386, %s24, 1
      %p388 = scmp.lt.s32.totalorder %s25, 0
      %s389 = scalar_select %p388, %s25, 0
      %s390 = smul.addr %s387, 4
      %s391 = sadd.s32 %s389, %s390
      %s392 = smul.addr %s391, 4
      %s393 = scalar_lea.vmem %s0, %s392
      %p394 = scmp.lt.s32.totalorder %s24, 1
      %s395 = scalar_select %p394, %s24, 1
      %s396 = smul.addr %s395, 4
      %s397 = smul.addr %s396, 4
      %s398 = scalar_lea.vmem %s1, %s397
      %p399 = scmp.lt.s32.totalorder %s24, 1
      %s400 = scalar_select %p399, %s24, 1
      %p401 = scmp.lt.s32.totalorder %s25, 0
      %s402 = scalar_select %p401, %s25, 0
      %s403 = smul.addr %s400, 16
      %s404 = sadd.s32 %s402, %s403
      %s405 = smul.addr %s404, 4
      %s406 = scalar_lea.vmem %s2, %s405
      %p407 = scmp.lt.s32.totalorder %s24, 1
      %s408 = scalar_select %p407, %s24, 1
      %p409 = scmp.lt.s32.totalorder %s25, 0
      %s410 = scalar_select %p409, %s25, 0
      %s411 = smul.addr %s408, 4
      %s412 = sadd.s32 %s410, %s411
      %s413 = smul.addr %s412, 8
      %s414 = scalar_lea.vmem %s9, %s413
      %v416 = vld [vmem:[%s393] sm:$0xf]
      %v417 = vld [vmem:[%s393 + $0x4] sm:$0xf]
      %v418 = vld [vmem:[%s393 + $0x8] sm:$0xf]
      %v419 = vld [vmem:[%s393 + $0xc] sm:$0xf]
      %v420 = vld [vmem:[%s398] sm:$0xf]
      %v421 = vld [vmem:[%s398 + $0x4] sm:$0xf]
      %v422 = vld [vmem:[%s398 + $0x8] sm:$0xf]
      %v423 = vld [vmem:[%s398 + $0xc] sm:$0xf]
      %v424 = vld [vmem:[%s3] sm:$0xf]
      %v425 = vld [vmem:[%s3 + $0x4] sm:$0xf]
      %v426 = vld [vmem:[%s3 + $0x8] sm:$0xf]
      %v427 = vld [vmem:[%s3 + $0xc] sm:$0xf]
      %v428 = vld [vmem:[%s4] sm:$0xff]
      %v429 = vld [vmem:[%s4 + $0x8] sm:$0xff]
      %v430 = vld [vmem:[%s4 + $0x10] sm:$0xff]
      %v431 = vld [vmem:[%s4 + $0x18] sm:$0xff]
      %433 = vset.pattern.permute.xlu0 0
      %434 = vperm.xlu0 %433, %v428
      %v435 = vpop.permute.xlu0 %434
      %438 = vset.pattern.permute.xlu0 0
      %439 = vperm.xlu0 %438, %v429
      %v440 = vpop.permute.xlu0 %439
      %443 = vset.pattern.permute.xlu0 0
      %444 = vperm.xlu0 %443, %v430
      %v445 = vpop.permute.xlu0 %444
      %448 = vset.pattern.permute.xlu0 0
      %449 = vperm.xlu0 %448, %v431
      %v450 = vpop.permute.xlu0 %449
      %v456 = vunpack.c.l.b16 %v424
      %v457 = vunpack.c.l.b16 %v425
      %v458 = vunpack.c.l.b16 %v426
      %v459 = vunpack.c.l.b16 %v427
      %v460 = vpack.c.b16 %v457, %v456
      %v461 = vpack.c.b16 %v459, %v458
      %v466 = vunpack.c.l.b16 %v416
      %v467 = vunpack.c.l.b16 %v417
      %v468 = vunpack.c.l.b16 %v418
      %v469 = vunpack.c.l.b16 %v419
      %v470 = vpack.c.b16 %v467, %v466
      %v471 = vpack.c.b16 %v469, %v468
      %vm474 = vcmask 261120
      %v476 = vsel %vm474, %v460, 0
      %v479 = vsel %vm474, %v461, 0
      %481 = vmatpush.bf16.msra.mxu0 0
      %482 = vmatpush.bf16.msra.mxu0 0
      %483 = vmatpush.bf16.msra.mxu0 0
      %484 = vmatpush.bf16.msra.mxu0 0
      %485 = vmatpush.bf16.msra.mxu0 0
      %486 = vmatpush.bf16.msra.mxu0 0
      %487 = vmatpush.bf16.msra.mxu0 %v471
      %488 = vmatpush.bf16.msra.mxu0 %v470
      %489 = vmatmul.bf16.gmra.mxu0 %v476
      %v490 = vpop.f32.mrf.mxu0
      %v491 = vadd.f32 %v435, %v490
      %v492 = vpop.f32.mrf.mxu0
      %v493 = vadd.f32 %v440, %v492
      %494 = vmatmul.bf16.gmra.mxu0 %v479
      %v495 = vpop.f32.mrf.mxu0
      %v496 = vadd.f32 %v445, %v495
      %v497 = vpop.f32.mrf.mxu0
      %v498 = vadd.f32 %v450, %v497
      %499 = vdwg.mxu0
      %v500 = vld [vmem:[%s5] sm:$0xf]
      %v501 = vld [vmem:[%s5 + $0x4] sm:$0xf]
      %v502 = vld [vmem:[%s5 + $0x8] sm:$0xf]
      %v503 = vld [vmem:[%s5 + $0xc] sm:$0xf]
      %v504 = vld [vmem:[%s5 + $0x10] sm:$0xf]
      %v505 = vld [vmem:[%s5 + $0x14] sm:$0xf]
      %v506 = vld [vmem:[%s5 + $0x18] sm:$0xf]
      %v507 = vld [vmem:[%s5 + $0x1c] sm:$0xf]
      %v508 = vld [vmem:[%s6] sm:$0xff]
      %v509 = vld [vmem:[%s6 + $0x8] sm:$0xff]
      %v510 = vld [vmem:[%s6 + $0x10] sm:$0xff]
      %v511 = vld [vmem:[%s6 + $0x18] sm:$0xff]
      %v512 = vld [vmem:[%s6 + $0x20] sm:$0xff]
      %v513 = vld [vmem:[%s6 + $0x28] sm:$0xff]
      %v514 = vld [vmem:[%s6 + $0x30] sm:$0xff]
      %v515 = vld [vmem:[%s6 + $0x38] sm:$0xff]
      %517 = vset.pattern.permute.xlu0 0
      %518 = vperm.xlu0 %517, %v508
      %v519 = vpop.permute.xlu0 %518
      %522 = vset.pattern.permute.xlu0 0
      %523 = vperm.xlu0 %522, %v509
      %v524 = vpop.permute.xlu0 %523
      %527 = vset.pattern.permute.xlu0 0
      %528 = vperm.xlu0 %527, %v510
      %v529 = vpop.permute.xlu0 %528
      %532 = vset.pattern.permute.xlu0 0
      %533 = vperm.xlu0 %532, %v511
      %v534 = vpop.permute.xlu0 %533
      %537 = vset.pattern.permute.xlu0 0
      %538 = vperm.xlu0 %537, %v512
      %v539 = vpop.permute.xlu0 %538
      %542 = vset.pattern.permute.xlu0 0
      %543 = vperm.xlu0 %542, %v513
      %v544 = vpop.permute.xlu0 %543
      %547 = vset.pattern.permute.xlu0 0
      %548 = vperm.xlu0 %547, %v514
      %v549 = vpop.permute.xlu0 %548
      %552 = vset.pattern.permute.xlu0 0
      %553 = vperm.xlu0 %552, %v515
      %v554 = vpop.permute.xlu0 %553
      %v564 = vunpack.c.l.b16 %v500
      %v565 = vunpack.c.l.b16 %v501
      %v566 = vunpack.c.l.b16 %v502
      %v567 = vunpack.c.l.b16 %v503
      %v568 = vunpack.c.l.b16 %v504
      %v569 = vunpack.c.l.b16 %v505
      %v570 = vunpack.c.l.b16 %v506
      %v571 = vunpack.c.l.b16 %v507
      %v572 = vpack.c.b16 %v565, %v564
      %v573 = vpack.c.b16 %v567, %v566
      %v574 = vpack.c.b16 %v569, %v568
      %v575 = vpack.c.b16 %v571, %v570
      %v580 = vunpack.c.l.b16 %v420
      %v581 = vunpack.c.l.b16 %v421
      %v582 = vunpack.c.l.b16 %v422
      %v583 = vunpack.c.l.b16 %v423
      %v584 = vpack.c.b16 %v581, %v580
      %v585 = vpack.c.b16 %v583, %v582
      %v589 = vsel %vm474, %v572, 0
      %v592 = vsel %vm474, %v573, 0
      %v595 = vsel %vm474, %v574, 0
      %v598 = vsel %vm474, %v575, 0
      %600 = vmatpush.bf16.msra.mxu0 0
      %601 = vmatpush.bf16.msra.mxu0 0
      %602 = vmatpush.bf16.msra.mxu0 0
      %603 = vmatpush.bf16.msra.mxu0 0
      %604 = vmatpush.bf16.msra.mxu0 0
      %605 = vmatpush.bf16.msra.mxu0 0
      %606 = vmatpush.bf16.msra.mxu0 %v585
      %607 = vmatpush.bf16.msra.mxu0 %v584
      %608 = vmatmul.bf16.gmra.mxu0 %v589
      %v609 = vpop.f32.mrf.mxu0
      %v610 = vadd.f32 %v519, %v609
      %v611 = vpop.f32.mrf.mxu0
      %v612 = vadd.f32 %v524, %v611
      %613 = vmatmul.bf16.gmra.mxu0 %v592
      %v614 = vpop.f32.mrf.mxu0
      %v615 = vadd.f32 %v529, %v614
      %v616 = vpop.f32.mrf.mxu0
      %v617 = vadd.f32 %v534, %v616
      %618 = vmatmul.bf16.gmra.mxu0 %v595
      %v619 = vpop.f32.mrf.mxu0
      %v620 = vadd.f32 %v539, %v619
      %v621 = vpop.f32.mrf.mxu0
      %v622 = vadd.f32 %v544, %v621
      %623 = vmatmul.bf16.gmra.mxu0 %v598
      %v624 = vpop.f32.mrf.mxu0
      %v625 = vadd.f32 %v549, %v624
      %v626 = vpop.f32.mrf.mxu0
      %v627 = vadd.f32 %v554, %v626
      %628 = vdwg.mxu0
      %v629 = vpack.c.bf16 %v491, %v491
      %v630 = vpack.c.bf16 %v493, %v493
      %v631 = vpack.c.bf16 %v496, %v496
      %v632 = vpack.c.bf16 %v498, %v498
      %v633 = vpack.c.bf16 %v610, %v610
      %v634 = vpack.c.bf16 %v612, %v612
      %v635 = vpack.c.bf16 %v615, %v615
      %v636 = vpack.c.bf16 %v617, %v617
      %v637 = vpack.c.bf16 %v620, %v620
      %v638 = vpack.c.bf16 %v622, %v622
      %v639 = vpack.c.bf16 %v625, %v625
      %v640 = vpack.c.bf16 %v627, %v627
      %v641 = vld [vmem:[%s406] sm:$0xf]
      %v642 = vld [vmem:[%s406 + $0x4] sm:$0xf]
      %v643 = vld [vmem:[%s406 + $0x8] sm:$0xf]
      %v644 = vld [vmem:[%s406 + $0xc] sm:$0xf]
      %v645 = vunpack.c.l.bf16 %v641
      %v646 = vunpack.c.l.bf16 %v642
      %v647 = vunpack.c.l.bf16 %v643
      %v648 = vunpack.c.l.bf16 %v644
      %649 = vxpose.xlu0.c.b16.start [1/8] %v633, 128
      %650 = vxpose.xlu0.c.b16.cont [2/8] 0, 128
      %651 = vxpose.xlu0.c.b16.cont [3/8] 0, 128
      %652 = vxpose.xlu0.c.b16.cont [4/8] 0, 128
      %653 = vxpose.xlu0.c.b16.cont [5/8] 0, 128
      %654 = vxpose.xlu0.c.b16.cont [6/8] 0, 128
      %655 = vxpose.xlu0.c.b16.cont [7/8] 0, 128
      %656 = vxpose.xlu0.c.b16.end [8/8] 0, 128
      %v657 = vpop.trf.xlu0
      %v658 = vpop.trf.xlu0
      %v659 = vpop.trf.xlu0
      %v660 = vpop.trf.xlu0
      %v661 = vpop.trf.xlu0
      %v662 = vpop.trf.xlu0
      %v663 = vpop.trf.xlu0
      %v664 = vpop.trf.xlu0
      %vm665 = vcmask 64512
      %v667 = vsel %vm665, %v657, 0
      %v670 = vsel %vm665, %v658, 0
      %vm672 = vcmask 1043456
      %v674 = vsel %vm672, %v629, 0
      %676 = vmatpush.bf16.msra.mxu0 0
      %677 = vmatpush.bf16.msra.mxu0 0
      %678 = vmatpush.bf16.msra.mxu0 0
      %679 = vmatpush.bf16.msra.mxu0 0
      %680 = vmatpush.bf16.msra.mxu0 0
      %681 = vmatpush.bf16.msra.mxu0 0
      %682 = vmatpush.bf16.msra.mxu0 0
      %683 = vmatpush.bf16.msra.mxu0 %v674
      %684 = vmatmul.bf16.gmra.mxu0 %v667
      %v685 = vpop.f32.mrf.mxu0
      %v686 = vadd.f32 %v645, %v685
      %v687 = vpop.f32.mrf.mxu0
      %v688 = vadd.f32 %v646, %v687
      %689 = vmatmul.bf16.gmra.mxu0 %v670
      %v690 = vpop.f32.mrf.mxu0
      %v691 = vadd.f32 %v647, %v690
      %v692 = vpop.f32.mrf.mxu0
      %v693 = vadd.f32 %v648, %v692
      %694 = vdwg.mxu0
      %v695 = vmax.f32 %v686, %v688
      %v696 = vmax.f32 %v691, %v693
      %v697 = vmax.f32 %v695, %v696
      %v698 = vrot.slane %v697, 4
      %v699 = vmax.f32 %v697, %v698
      %v700 = vrot.slane %v699, 2
      %v701 = vmax.f32 %v699, %v700
      %v702 = vrot.slane %v701, 1
      %v703 = vmax.f32 %v701, %v702
      %v704 = vsub.f32 %v686, %v703
      %v705 = vsub.f32 %v688, %v703
      %v706 = vsub.f32 %v691, %v703
      %v707 = vsub.f32 %v693, %v703
      %v708 = vmul.f32 %v704, 1.442695
      %v709 = vpow.pop %v708
      %v710 = vmul.f32 %v705, 1.442695
      %v711 = vpow.pop %v710
      %v712 = vmul.f32 %v706, 1.442695
      %v713 = vpow.pop %v712
      %v714 = vmul.f32 %v707, 1.442695
      %v715 = vpow.pop %v714
      %v716 = vadd.f32 %v709, %v711
      %v717 = vadd.f32 %v716, %v713
      %v718 = vadd.f32 %v717, %v715
      %v719 = vrot.slane %v718, 4
      %v720 = vadd.f32 %v718, %v719
      %v721 = vrot.slane %v720, 2
      %v722 = vadd.f32 %v720, %v721
      %v723 = vrot.slane %v722, 1
      %v724 = vadd.f32 %v722, %v723
      %v725 = vrcp.pop %v724
      %v726 = vmul.f32 %v709, %v725
      %v727 = vmul.f32 %v711, %v725
      %v728 = vmul.f32 %v713, %v725
      %v729 = vmul.f32 %v715, %v725
      %v730 = vpack.c.bf16 %v727, %v726
      %v731 = vpack.c.bf16 %v729, %v728
      %v733 = vsel %vm474, %v637, 0
      %735 = vmatpush.bf16.msra.mxu0 0
      %736 = vmatpush.bf16.msra.mxu0 0
      %737 = vmatpush.bf16.msra.mxu0 0
      %738 = vmatpush.bf16.msra.mxu0 0
      %739 = vmatpush.bf16.msra.mxu0 0
      %740 = vmatpush.bf16.msra.mxu0 0
      %741 = vmatpush.bf16.msra.mxu0 %v731
      %742 = vmatpush.bf16.msra.mxu0 %v730
      %743 = vmatmul.bf16.gmra.mxu0 %v733
      %v744 = vpop.f32.mrf.mxu0
      %v745 = vadd.f32 0.0, %v744
      %v746 = vpop.f32.mrf.mxu0
      %747 = vdwg.mxu0
      %s748 = scalar_lea.vmem %s406, 16
      %v749 = vld [vmem:[%s748] sm:$0xf]
      %v750 = vld [vmem:[%s748 + $0x4] sm:$0xf]
      %v751 = vld [vmem:[%s748 + $0x8] sm:$0xf]
      %v752 = vld [vmem:[%s748 + $0xc] sm:$0xf]
      %v753 = vunpack.c.l.bf16 %v749
      %v754 = vunpack.c.l.bf16 %v750
      %v755 = vunpack.c.l.bf16 %v751
      %v756 = vunpack.c.l.bf16 %v752
      %757 = vxpose.xlu0.c.b16.start [1/8] %v634, 128
      %758 = vxpose.xlu0.c.b16.cont [2/8] 0, 128
      %759 = vxpose.xlu0.c.b16.cont [3/8] 0, 128
      %760 = vxpose.xlu0.c.b16.cont [4/8] 0, 128
      %761 = vxpose.xlu0.c.b16.cont [5/8] 0, 128
      %762 = vxpose.xlu0.c.b16.cont [6/8] 0, 128
      %763 = vxpose.xlu0.c.b16.cont [7/8] 0, 128
      %764 = vxpose.xlu0.c.b16.end [8/8] 0, 128
      %v765 = vpop.trf.xlu0
      %v766 = vpop.trf.xlu0
      %v767 = vpop.trf.xlu0
      %v768 = vpop.trf.xlu0
      %v769 = vpop.trf.xlu0
      %v770 = vpop.trf.xlu0
      %v771 = vpop.trf.xlu0
      %v772 = vpop.trf.xlu0
      %v774 = vsel %vm665, %v765, 0
      %v777 = vsel %vm665, %v766, 0
      %v780 = vsel %vm672, %v630, 0
      %782 = vmatpush.bf16.msra.mxu0 0
      %783 = vmatpush.bf16.msra.mxu0 0
      %784 = vmatpush.bf16.msra.mxu0 0
      %785 = vmatpush.bf16.msra.mxu0 0
      %786 = vmatpush.bf16.msra.mxu0 0
      %787 = vmatpush.bf16.msra.mxu0 0
      %788 = vmatpush.bf16.msra.mxu0 0
      %789 = vmatpush.bf16.msra.mxu0 %v780
      %790 = vmatmul.bf16.gmra.mxu0 %v774
      %v791 = vpop.f32.mrf.mxu0
      %v792 = vadd.f32 %v753, %v791
      %v793 = vpop.f32.mrf.mxu0
      %v794 = vadd.f32 %v754, %v793
      %795 = vmatmul.bf16.gmra.mxu0 %v777
      %v796 = vpop.f32.mrf.mxu0
      %v797 = vadd.f32 %v755, %v796
      %v798 = vpop.f32.mrf.mxu0
      %v799 = vadd.f32 %v756, %v798
      %800 = vdwg.mxu0
      %v801 = vmax.f32 %v792, %v794
      %v802 = vmax.f32 %v797, %v799
      %v803 = vmax.f32 %v801, %v802
      %v804 = vrot.slane %v803, 4
      %v805 = vmax.f32 %v803, %v804
      %v806 = vrot.slane %v805, 2
      %v807 = vmax.f32 %v805, %v806
      %v808 = vrot.slane %v807, 1
      %v809 = vmax.f32 %v807, %v808
      %v810 = vsub.f32 %v792, %v809
      %v811 = vsub.f32 %v794, %v809
      %v812 = vsub.f32 %v797, %v809
      %v813 = vsub.f32 %v799, %v809
      %v814 = vmul.f32 %v810, 1.442695
      %v815 = vpow.pop %v814
      %v816 = vmul.f32 %v811, 1.442695
      %v817 = vpow.pop %v816
      %v818 = vmul.f32 %v812, 1.442695
      %v819 = vpow.pop %v818
      %v820 = vmul.f32 %v813, 1.442695
      %v821 = vpow.pop %v820
      %v822 = vadd.f32 %v815, %v817
      %v823 = vadd.f32 %v822, %v819
      %v824 = vadd.f32 %v823, %v821
      %v825 = vrot.slane %v824, 4
      %v826 = vadd.f32 %v824, %v825
      %v827 = vrot.slane %v826, 2
      %v828 = vadd.f32 %v826, %v827
      %v829 = vrot.slane %v828, 1
      %v830 = vadd.f32 %v828, %v829
      %v831 = vrcp.pop %v830
      %v832 = vmul.f32 %v815, %v831
      %v833 = vmul.f32 %v817, %v831
      %v834 = vmul.f32 %v819, %v831
      %v835 = vmul.f32 %v821, %v831
      %v836 = vpack.c.bf16 %v833, %v832
      %v837 = vpack.c.bf16 %v835, %v834
      %v839 = vsel %vm474, %v638, 0
      %841 = vmatpush.bf16.msra.mxu0 0
      %842 = vmatpush.bf16.msra.mxu0 0
      %843 = vmatpush.bf16.msra.mxu0 0
      %844 = vmatpush.bf16.msra.mxu0 0
      %845 = vmatpush.bf16.msra.mxu0 0
      %846 = vmatpush.bf16.msra.mxu0 0
      %847 = vmatpush.bf16.msra.mxu0 %v837
      %848 = vmatpush.bf16.msra.mxu0 %v836
      %849 = vmatmul.bf16.gmra.mxu0 %v839
      %v850 = vpop.f32.mrf.mxu0
      %v851 = vadd.f32 0.0, %v850
      %v852 = vpop.f32.mrf.mxu0
      %853 = vdwg.mxu0
      %s854 = scalar_lea.vmem %s406, 32
      %v855 = vld [vmem:[%s854] sm:$0xf]
      %v856 = vld [vmem:[%s854 + $0x4] sm:$0xf]
      %v857 = vld [vmem:[%s854 + $0x8] sm:$0xf]
      %v858 = vld [vmem:[%s854 + $0xc] sm:$0xf]
      %v859 = vunpack.c.l.bf16 %v855
      %v860 = vunpack.c.l.bf16 %v856
      %v861 = vunpack.c.l.bf16 %v857
      %v862 = vunpack.c.l.bf16 %v858
      %863 = vxpose.xlu0.c.b16.start [1/8] %v635, 128
      %864 = vxpose.xlu0.c.b16.cont [2/8] 0, 128
      %865 = vxpose.xlu0.c.b16.cont [3/8] 0, 128
      %866 = vxpose.xlu0.c.b16.cont [4/8] 0, 128
      %867 = vxpose.xlu0.c.b16.cont [5/8] 0, 128
      %868 = vxpose.xlu0.c.b16.cont [6/8] 0, 128
      %869 = vxpose.xlu0.c.b16.cont [7/8] 0, 128
      %870 = vxpose.xlu0.c.b16.end [8/8] 0, 128
      %v871 = vpop.trf.xlu0
      %v872 = vpop.trf.xlu0
      %v873 = vpop.trf.xlu0
      %v874 = vpop.trf.xlu0
      %v875 = vpop.trf.xlu0
      %v876 = vpop.trf.xlu0
      %v877 = vpop.trf.xlu0
      %v878 = vpop.trf.xlu0
      %v880 = vsel %vm665, %v871, 0
      %v883 = vsel %vm665, %v872, 0
      %v886 = vsel %vm672, %v631, 0
      %888 = vmatpush.bf16.msra.mxu0 0
      %889 = vmatpush.bf16.msra.mxu0 0
      %890 = vmatpush.bf16.msra.mxu0 0
      %891 = vmatpush.bf16.msra.mxu0 0
      %892 = vmatpush.bf16.msra.mxu0 0
      %893 = vmatpush.bf16.msra.mxu0 0
      %894 = vmatpush.bf16.msra.mxu0 0
      %895 = vmatpush.bf16.msra.mxu0 %v886
      %896 = vmatmul.bf16.gmra.mxu0 %v880
      %v897 = vpop.f32.mrf.mxu0
      %v898 = vadd.f32 %v859, %v897
      %v899 = vpop.f32.mrf.mxu0
      %v900 = vadd.f32 %v860, %v899
      %901 = vmatmul.bf16.gmra.mxu0 %v883
      %v902 = vpop.f32.mrf.mxu0
      %v903 = vadd.f32 %v861, %v902
      %v904 = vpop.f32.mrf.mxu0
      %v905 = vadd.f32 %v862, %v904
      %906 = vdwg.mxu0
      %v907 = vmax.f32 %v898, %v900
      %v908 = vmax.f32 %v903, %v905
      %v909 = vmax.f32 %v907, %v908
      %v910 = vrot.slane %v909, 4
      %v911 = vmax.f32 %v909, %v910
      %v912 = vrot.slane %v911, 2
      %v913 = vmax.f32 %v911, %v912
      %v914 = vrot.slane %v913, 1
      %v915 = vmax.f32 %v913, %v914
      %v916 = vsub.f32 %v898, %v915
      %v917 = vsub.f32 %v900, %v915
      %v918 = vsub.f32 %v903, %v915
      %v919 = vsub.f32 %v905, %v915
      %v920 = vmul.f32 %v916, 1.442695
      %v921 = vpow.pop %v920
      %v922 = vmul.f32 %v917, 1.442695
      %v923 = vpow.pop %v922
      %v924 = vmul.f32 %v918, 1.442695
      %v925 = vpow.pop %v924
      %v926 = vmul.f32 %v919, 1.442695
      %v927 = vpow.pop %v926
      %v928 = vadd.f32 %v921, %v923
      %v929 = vadd.f32 %v928, %v925
      %v930 = vadd.f32 %v929, %v927
      %v931 = vrot.slane %v930, 4
      %v932 = vadd.f32 %v930, %v931
      %v933 = vrot.slane %v932, 2
      %v934 = vadd.f32 %v932, %v933
      %v935 = vrot.slane %v934, 1
      %v936 = vadd.f32 %v934, %v935
      %v937 = vrcp.pop %v936
      %v938 = vmul.f32 %v921, %v937
      %v939 = vmul.f32 %v923, %v937
      %v940 = vmul.f32 %v925, %v937
      %v941 = vmul.f32 %v927, %v937
      %v942 = vpack.c.bf16 %v939, %v938
      %v943 = vpack.c.bf16 %v941, %v940
      %v945 = vsel %vm474, %v639, 0
      %947 = vmatpush.bf16.msra.mxu0 0
      %948 = vmatpush.bf16.msra.mxu0 0
      %949 = vmatpush.bf16.msra.mxu0 0
      %950 = vmatpush.bf16.msra.mxu0 0
      %951 = vmatpush.bf16.msra.mxu0 0
      %952 = vmatpush.bf16.msra.mxu0 0
      %953 = vmatpush.bf16.msra.mxu0 %v943
      %954 = vmatpush.bf16.msra.mxu0 %v942
      %955 = vmatmul.bf16.gmra.mxu0 %v945
      %v956 = vpop.f32.mrf.mxu0
      %v957 = vadd.f32 0.0, %v956
      %v958 = vpop.f32.mrf.mxu0
      %959 = vdwg.mxu0
      %s960 = scalar_lea.vmem %s406, 48
      %v961 = vld [vmem:[%s960] sm:$0xf]
      %v962 = vld [vmem:[%s960 + $0x4] sm:$0xf]
      %v963 = vld [vmem:[%s960 + $0x8] sm:$0xf]
      %v964 = vld [vmem:[%s960 + $0xc] sm:$0xf]
      %v965 = vunpack.c.l.bf16 %v961
      %v966 = vunpack.c.l.bf16 %v962
      %v967 = vunpack.c.l.bf16 %v963
      %v968 = vunpack.c.l.bf16 %v964
      %969 = vxpose.xlu0.c.b16.start [1/8] %v636, 128
      %970 = vxpose.xlu0.c.b16.cont [2/8] 0, 128
      %971 = vxpose.xlu0.c.b16.cont [3/8] 0, 128
      %972 = vxpose.xlu0.c.b16.cont [4/8] 0, 128
      %973 = vxpose.xlu0.c.b16.cont [5/8] 0, 128
      %974 = vxpose.xlu0.c.b16.cont [6/8] 0, 128
      %975 = vxpose.xlu0.c.b16.cont [7/8] 0, 128
      %976 = vxpose.xlu0.c.b16.end [8/8] 0, 128
      %v977 = vpop.trf.xlu0
      %v978 = vpop.trf.xlu0
      %v979 = vpop.trf.xlu0
      %v980 = vpop.trf.xlu0
      %v981 = vpop.trf.xlu0
      %v982 = vpop.trf.xlu0
      %v983 = vpop.trf.xlu0
      %v984 = vpop.trf.xlu0
      %v986 = vsel %vm665, %v977, 0
      %v989 = vsel %vm665, %v978, 0
      %v992 = vsel %vm672, %v632, 0
      %994 = vmatpush.bf16.msra.mxu0 0
      %995 = vmatpush.bf16.msra.mxu0 0
      %996 = vmatpush.bf16.msra.mxu0 0
      %997 = vmatpush.bf16.msra.mxu0 0
      %998 = vmatpush.bf16.msra.mxu0 0
      %999 = vmatpush.bf16.msra.mxu0 0
      %1000 = vmatpush.bf16.msra.mxu0 0
      %1001 = vmatpush.bf16.msra.mxu0 %v992
      %1002 = vmatmul.bf16.gmra.mxu0 %v986
      %v1003 = vpop.f32.mrf.mxu0
      %v1004 = vadd.f32 %v965, %v1003
      %v1005 = vpop.f32.mrf.mxu0
      %v1006 = vadd.f32 %v966, %v1005
      %1007 = vmatmul.bf16.gmra.mxu0 %v989
      %v1008 = vpop.f32.mrf.mxu0
      %v1009 = vadd.f32 %v967, %v1008
      %v1010 = vpop.f32.mrf.mxu0
      %v1011 = vadd.f32 %v968, %v1010
      %1012 = vdwg.mxu0
      %v1013 = vmax.f32 %v1004, %v1006
      %v1014 = vmax.f32 %v1009, %v1011
      %v1015 = vmax.f32 %v1013, %v1014
      %v1016 = vrot.slane %v1015, 4
      %v1017 = vmax.f32 %v1015, %v1016
      %v1018 = vrot.slane %v1017, 2
      %v1019 = vmax.f32 %v1017, %v1018
      %v1020 = vrot.slane %v1019, 1
      %v1021 = vmax.f32 %v1019, %v1020
      %v1022 = vsub.f32 %v1004, %v1021
      %v1023 = vsub.f32 %v1006, %v1021
      %v1024 = vsub.f32 %v1009, %v1021
      %v1025 = vsub.f32 %v1011, %v1021
      %v1026 = vmul.f32 %v1022, 1.442695
      %v1027 = vpow.pop %v1026
      %v1028 = vmul.f32 %v1023, 1.442695
      %v1029 = vpow.pop %v1028
      %v1030 = vmul.f32 %v1024, 1.442695
      %v1031 = vpow.pop %v1030
      %v1032 = vmul.f32 %v1025, 1.442695
      %v1033 = vpow.pop %v1032
      %v1034 = vadd.f32 %v1027, %v1029
      %v1035 = vadd.f32 %v1034, %v1031
      %v1036 = vadd.f32 %v1035, %v1033
      %v1037 = vrot.slane %v1036, 4
      %v1038 = vadd.f32 %v1036, %v1037
      %v1039 = vrot.slane %v1038, 2
      %v1040 = vadd.f32 %v1038, %v1039
      %v1041 = vrot.slane %v1040, 1
      %v1042 = vadd.f32 %v1040, %v1041
      %v1043 = vrcp.pop %v1042
      %v1044 = vmul.f32 %v1027, %v1043
      %v1045 = vmul.f32 %v1029, %v1043
      %v1046 = vmul.f32 %v1031, %v1043
      %v1047 = vmul.f32 %v1033, %v1043
      %v1048 = vpack.c.bf16 %v1045, %v1044
      %v1049 = vpack.c.bf16 %v1047, %v1046
      %v1051 = vsel %vm474, %v640, 0
      %1053 = vmatpush.bf16.msra.mxu0 0
      %1054 = vmatpush.bf16.msra.mxu0 0
      %1055 = vmatpush.bf16.msra.mxu0 0
      %1056 = vmatpush.bf16.msra.mxu0 0
      %1057 = vmatpush.bf16.msra.mxu0 0
      %1058 = vmatpush.bf16.msra.mxu0 0
      %1059 = vmatpush.bf16.msra.mxu0 %v1049
      %1060 = vmatpush.bf16.msra.mxu0 %v1048
      %1061 = vmatmul.bf16.gmra.mxu0 %v1051
      %v1062 = vpop.f32.mrf.mxu0
      %v1063 = vadd.f32 0.0, %v1062
      %v1064 = vpop.f32.mrf.mxu0
      %1065 = vdwg.mxu0
      %v1066 = vpack.c.bf16 %v851, %v745
      %v1067 = vpack.c.bf16 %v1063, %v957
      %v1068 = vld [vmem:[%s7] sm:$0xf]
      %v1069 = vld [vmem:[%s7 + $0x4] sm:$0xf]
      %v1070 = vld [vmem:[%s7 + $0x8] sm:$0xf]
      %v1071 = vld [vmem:[%s7 + $0xc] sm:$0xf]
      %v1072 = vld [vmem:[%s8] sm:$0xff]
      %v1073 = vld [vmem:[%s8 + $0x8] sm:$0xff]
      %v1074 = vld [vmem:[%s8 + $0x10] sm:$0xff]
      %v1075 = vld [vmem:[%s8 + $0x18] sm:$0xff]
      %1077 = vset.pattern.permute.xlu0 0
      %1078 = vperm.xlu0 %1077, %v1072
      %v1079 = vpop.permute.xlu0 %1078
      %1082 = vset.pattern.permute.xlu0 0
      %1083 = vperm.xlu0 %1082, %v1073
      %v1084 = vpop.permute.xlu0 %1083
      %1087 = vset.pattern.permute.xlu0 0
      %1088 = vperm.xlu0 %1087, %v1074
      %v1089 = vpop.permute.xlu0 %1088
      %1092 = vset.pattern.permute.xlu0 0
      %1093 = vperm.xlu0 %1092, %v1075
      %v1094 = vpop.permute.xlu0 %1093
      %v1100 = vunpack.c.l.b16 %v1068
      %v1101 = vunpack.c.l.b16 %v1069
      %v1102 = vunpack.c.l.b16 %v1070
      %v1103 = vunpack.c.l.b16 %v1071
      %v1104 = vpack.c.b16 %v1101, %v1100
      %v1105 = vpack.c.b16 %v1103, %v1102
      %v1107 = vsel %vm474, %v1104, 0
      %v1110 = vsel %vm474, %v1105, 0
      %1112 = vmatpush.bf16.msra.mxu0 0
      %1113 = vmatpush.bf16.msra.mxu0 0
      %1114 = vmatpush.bf16.msra.mxu0 0
      %1115 = vmatpush.bf16.msra.mxu0 0
      %1116 = vmatpush.bf16.msra.mxu0 0
      %1117 = vmatpush.bf16.msra.mxu0 0
      %1118 = vmatpush.bf16.msra.mxu0 %v1067
      %1119 = vmatpush.bf16.msra.mxu0 %v1066
      %1120 = vmatmul.bf16.gmra.mxu0 %v1107
      %v1121 = vpop.f32.mrf.mxu0
      %v1122 = vadd.f32 %v1079, %v1121
      %v1123 = vpop.f32.mrf.mxu0
      %v1124 = vadd.f32 %v1084, %v1123
      %1125 = vmatmul.bf16.gmra.mxu0 %v1110
      %v1126 = vpop.f32.mrf.mxu0
      %v1127 = vadd.f32 %v1089, %v1126
      %v1128 = vpop.f32.mrf.mxu0
      %v1129 = vadd.f32 %v1094, %v1128
      %1130 = vdwg.mxu0
      %1131 = vst [vmem:[%s414] sm:$0xff] %v1122
      %1132 = vst [vmem:[%s414 + $0x8] sm:$0xff] %v1124
      %1133 = vst [vmem:[%s414 + $0x10] sm:$0xff] %v1127
      %1134 = vst [vmem:[%s414 + $0x18] sm:$0xff] %v1129
      %p1135 = scmp.lt.s32.totalorder %s24, 1
      %s1136 = scalar_select %p1135, %s24, 1
      %p1137 = scmp.lt.s32.totalorder %s25, 0
      %s1138 = scalar_select %p1137, %s25, 0
      %s1139 = smul.addr %s1136, 4
      %s1140 = sadd.s32 %s1138, %s1139
      %s1141 = smul.addr %s1140, 8
      %s1142 = scalar_lea.vmem %s9, %s1141
      // Predicated region
      $region57: #{d_attention_fuse_forward.1} parent=55 // pred_check
        %p1143 = pneg %p260
      $region58: #{d_attention_fuse_forward.1} parent=55 // pred_check_branch
        %1145 = sbr.rel (%p1143) target = $region60
      $region59: #{d_attention_fuse_forward.1} parent=55 // pred_region
        _
      $region60: #{d_attention_fuse_forward.1} parent=55 // pred_fallthru
        _
    $region56: #{d_attention_fuse_forward.1} parent=5 // pred_fallthru
      _
    %p1146 = scmp.le.s32.totalorder 2, %s15
    // Predicated region
    $region61: #{d_attention_fuse_forward.1} parent=5 // pred_check
      %p1147 = pneg %p1146
    $region62: #{d_attention_fuse_forward.1} parent=5 // pred_check_branch
      %1149 = sbr.rel (%p1147) target = $region64
    $region63: #{d_attention_fuse_forward.1} parent=5 // pred_region
      %s1150 = ssub.s32 %s15, 2
      // Predicated region
      $region65: #{d_attention_fuse_forward.1} parent=63 // pred_check
        %p1151 = pneg %p266
      $region66: #{d_attention_fuse_forward.1} parent=63 // pred_check_branch
        %1153 = sbr.rel (%p1151) target = $region68
      $region67: #{d_attention_fuse_forward.1} parent=63 // pred_region
        %p1154 = scmp.lt.s32.totalorder %s26, 1
        %s1155 = scalar_select %p1154, %s26, 1
        %p1156 = scmp.lt.s32.totalorder %s27, 0
        %s1157 = scalar_select %p1156, %s27, 0
        %s1158 = smul.addr %s1155, 4
        %s1159 = sadd.s32 %s1157, %s1158
        %s1160 = smul.addr %s1159, 8
        %s1161 = scalar_lea.vmem %s9, %s1160
      $region68: #{d_attention_fuse_forward.1} parent=63 // pred_fallthru
        _
    $region64: #{d_attention_fuse_forward.1} parent=5 // pred_fallthru
      _
  $region6: #{d_attention_fuse_forward.1} parent=0 // loop_footer
    %s19 = sadd.s32 1, %s15
  $region7: #{d_attention_fuse_forward.1} parent=0 // loop_footer_branch
    %14 = sbr.rel target = $region3
  $region8: #{d_attention_fuse_forward.1} parent=0 // loop_exit
    _

</llo_original>
